<compile_context>
chip_gen: v5e
topology: v5e:2x2
jax: 0.10.0
libtpu: 0.0.40
codegen_flags: <defaults>
</compile_context>

<pallas_src>
import functools

import jax
import jax.numpy as jnp
import numpy as np
from jax.experimental import pallas as pl
from jax.experimental.pallas import tpu as pltpu


def _pick_row_tile(n):
    """Largest row tile (multiple of 8, <= 1024) that divides n, else full n."""
    for tn in (1024, 512, 256, 128, 64, 32, 16, 8):
        if n % tn == 0:
            return tn
    return n


def _adaptive_sin_kernel_resident(omega_0, precision, idx_ref, x_ref, w_ref,
                                  b_ref, o_ref):
    """grid = (B, N//tn); the whole weight tensor is resident in VMEM.

    idx_ref : SMEM (B,) int32 scalar-prefetch channel ids
    x_ref   : VMEM (1, tn, IN)
    w_ref   : VMEM (C, IN, OUT)  full weight, constant index_map -> DMA'd once
    b_ref   : VMEM (1, OUT)      bias (f32)
    o_ref   : VMEM (1, tn, OUT)
    """
    ch = idx_ref[pl.program_id(0)]
    acc = jnp.dot(x_ref[0], w_ref[ch], preferred_element_type=jnp.float32,
                  precision=precision)                      # (tn, OUT), f32
    o_ref[0] = jnp.sin(omega_0 * (acc + b_ref[...])).astype(o_ref.dtype)


def _adaptive_sin_kernel_gather(omega_0, precision, idx_ref, x_ref, w_ref,
                                b_ref, o_ref):
    """grid = (B, N//tn); one gathered weight channel per b via the index_map."""
    del idx_ref  # consumed only by the weight BlockSpec index_map
    acc = jnp.dot(x_ref[0], w_ref[0], preferred_element_type=jnp.float32,
                  precision=precision)                      # (tn, OUT), f32
    o_ref[0] = jnp.sin(omega_0 * (acc + b_ref[...])).astype(o_ref.dtype)


def adaptive_sin_layer(x, indices, weight, bias, omega_0=30.0,
                       compute_dtype=None, precision=None,
                       max_resident_weight_bytes=8 * 1024 * 1024):
    """Pallas TPU implementation of AdaptiveSinLayer.forward(input, indices, flex=False).

    x:       (B, N, IN)   float32
    indices: (B,)         int    -- which weight channel each batch tile uses
    weight:  (C, IN, OUT) float32
    bias:    (1, OUT)     float32
    compute_dtype: dtype fed to the MXU (None -> keep x.dtype).  jnp.bfloat16 is a
        good choice on v5e/v6e/v7x (MXU is bf16-native on all three) and halves
        x/weight DMA bytes; accumulation, bias add and sin stay in f32.
    precision: forwarded to jnp.dot.  Default (None) uses the MXU's default
        lowering (bf16 passes for f32 inputs) -- the real accuracy contract of the
        default path is therefore ~bf16-matmul accuracy amplified by omega_0.
        Pass jax.lax.Precision.HIGHEST for true f32 accumulation (3x MXU passes).
    max_resident_weight_bytes: if the raw weight tensor is at most this large it
        is kept fully resident in VMEM (no per-step weight DMA); otherwise the
        per-channel gathered-weight path is used.
    returns: (B, N, OUT)  x.dtype
    """
    B, N, IN = x.shape
    C, IN_w, OUT = weight.shape
    assert IN == IN_w
    assert bias.shape == (1, OUT)
    out_dtype = x.dtype

    # Correctness: clamp untrusted indices so neither the gathered-weight DMA nor
    # the in-kernel dynamic VMEM index can go out of bounds.  (Note: this silently
    # remaps bad indices rather than failing.)
    indices = jnp.clip(indices.astype(jnp.int32), 0, C - 1)

    # Optional bf16 MXU-input path (v5e/v6e/v7x); f32 accumulate + f32 sin epilogue.
    if compute_dtype is not None and compute_dtype != x.dtype:
        x = x.astype(compute_dtype)
        weight = weight.astype(compute_dtype)
    bias = bias.astype(jnp.float32)

    tn = _pick_row_tile(N)
    n_tiles = N // tn if N % tn == 0 else 1

    w_itemsize = jnp.dtype(weight.dtype).itemsize
    weight_bytes = C * IN * OUT * w_itemsize
    resident = weight_bytes <= max_resident_weight_bytes

    # Explicit VMEM budget (v7x has 64 MiB physical / 32 MiB default scoped).
    x_itemsize = jnp.dtype(x.dtype).itemsize
    o_itemsize = jnp.dtype(out_dtype).itemsize
    tile_bytes = 2 * tn * (IN * x_itemsize + OUT * o_itemsize)   # double-buffered x/out
    w_vmem = 2 * (weight_bytes if resident else IN * OUT * w_itemsize)
    est = tile_bytes + w_vmem + 2 * OUT * 4 + (1 << 20)
    vmem_limit = int(min(64 << 20, max(32 << 20, est)))

    if resident:
        kernel = functools.partial(_adaptive_sin_kernel_resident,
                                   float(omega_0), precision)
        # Full weight tensor, constant block index -> fetched once, reused forever.
        w_spec = pl.BlockSpec((C, IN, OUT), lambda b, n, idx: (0, 0, 0))
    else:
        kernel = functools.partial(_adaptive_sin_kernel_gather,
                                   float(omega_0), precision)
        # One gathered channel per b; same block index across the n axis, so the
        # weight is DMA'd once per b and reused across all N tiles.
        w_spec = pl.BlockSpec((1, IN, OUT), lambda b, n, idx: (idx[b], 0, 0))

    grid_spec = pltpu.PrefetchScalarGridSpec(
        num_scalar_prefetch=1,          # `indices` land in SMEM; feed index_maps/kernel
        grid=(B, n_tiles),
        in_specs=[
            pl.BlockSpec((1, tn, IN), lambda b, n, idx: (b, n, 0)),   # x tile (b, n)
            w_spec,                                                   # weight
            pl.BlockSpec((1, OUT), lambda b, n, idx: (0, 0)),         # shared bias
        ],
        out_specs=pl.BlockSpec((1, tn, OUT), lambda b, n, idx: (b, n, 0)),
    )

    return pl.pallas_call(
        kernel,
        out_shape=jax.ShapeDtypeStruct((B, N, OUT), out_dtype),
        grid_spec=grid_spec,
        # Every grid step writes a disjoint output tile (no carried accumulator),
        # so both axes are legally parallel -> balanced across v7x's 2 TensorCores.
        compiler_params=pltpu.CompilerParams(
            dimension_semantics=("parallel", "parallel"),
            vmem_limit_bytes=vmem_limit),
    )(indices, x, weight, bias)


# TODO(synk): the flex=True path (list of per-tile tensors with ragged N) is not
# implemented; it would need BoundedSlice / ragged handling.


if __name__ == "__main__":
    IN_FEATURES = 32
    OUT_FEATURES = 32
    N_CHANNELS = 4      # channel_size of AdaptiveLinearWithChannel
    B = 3               # number of selected tiles (== len(indices))
    N = 64              # samples per tile
    OMEGA_0 = 30.0

    key = jax.random.PRNGKey(0)
    kx, kw, kb, ki = jax.random.split(key, 4)

    # init_weights with is_first=False: uniform(-bound, bound), bound = sqrt(6/in)/omega_0
    bound = float(np.sqrt(6.0 / IN_FEATURES) / OMEGA_0)
    weight = jax.random.uniform(kw, (N_CHANNELS, IN_FEATURES, OUT_FEATURES),
                                jnp.float32, -bound, bound)
    # torch stores bias as (1, 1, OUT); forward uses bias[0] -> (1, OUT)
    bias = jax.random.uniform(kb, (1, OUT_FEATURES), jnp.float32, -bound, bound)
    x = jax.random.normal(kx, (B, N, IN_FEATURES), dtype=jnp.float32)
    indices = jax.random.randint(ki, (B,), 0, N_CHANNELS, dtype=jnp.int32)

    ref = jnp.sin(OMEGA_0 * (jnp.einsum("bni,bio->bno", x, weight[indices]) + bias))

    # ---- default f32 path, resident-weight fast path (weights are only 16 KiB) ----
    out = adaptive_sin_layer(x, indices, weight, bias, omega_0=OMEGA_0)
    out = jax.block_until_ready(out)
    # Tolerance: default dot precision lowers f32 matmuls to bf16 MXU passes,
    # amplified ~30x by omega_0 before the sin (documented accuracy contract).
    np.testing.assert_allclose(np.asarray(out), np.asarray(ref), rtol=3e-2, atol=3e-2)

    # ---- gathered-weight fallback path (forced; exercises the large-weight case) ----
    out_g = adaptive_sin_layer(x, indices, weight, bias, omega_0=OMEGA_0,
                               max_resident_weight_bytes=0)
    out_g = jax.block_until_ready(out_g)
    np.testing.assert_allclose(np.asarray(out_g), np.asarray(ref), rtol=3e-2, atol=3e-2)

    # ---- bf16 MXU input path (v5e/v6e/v7x); f32 accumulation + f32 sin ----
    out_bf16 = adaptive_sin_layer(x, indices, weight, bias, omega_0=OMEGA_0,
                                  compute_dtype=jnp.bfloat16)
    out_bf16 = jax.block_until_ready(out_bf16)
    x_b = x.astype(jnp.bfloat16).astype(jnp.float32)
    w_b = weight.astype(jnp.bfloat16).astype(jnp.float32)
    ref_b = jnp.sin(OMEGA_0 * (jnp.einsum("bni,bio->bno", x_b, w_b[indices]) + bias))
    np.testing.assert_allclose(np.asarray(out_bf16), np.asarray(ref_b), rtol=5e-3, atol=5e-3)

    print("KERNEL_OK")
</pallas_src>

<mosaic_0001>
module attributes {stable_mosaic.version = 11 : i64} {
  func.func @_adaptive_sin_kernel_resident(%arg0: i32, %arg1: i32, %arg2: memref<3xi32, #tpu.memory_space<smem>>, %arg3: memref<1x64x32xf32, #tpu.memory_space<vmem>>, %arg4: memref<4x32x32xf32, #tpu.memory_space<vmem>>, %arg5: memref<1x32xf32, #tpu.memory_space<vmem>>, %arg6: memref<1x64x32xf32, #tpu.memory_space<vmem>>) attributes {dimension_semantics = [#tpu.dimension_semantics<parallel>, #tpu.dimension_semantics<parallel>], iteration_bounds = array<i64: 3, 1>, scalar_prefetch = 1 : i64, scratch_operands = 0 : i64, tpu.core_type = #tpu.core_type<tc>, window_params = [{transform_indices = @transform_0, window_bounds = array<i64: 1, 64, 32>}, {pipeline_mode = #tpu.pipeline_mode<synchronous>, transform_indices = @transform_1, window_bounds = array<i64: 4, 32, 32>}, {pipeline_mode = #tpu.pipeline_mode<synchronous>, transform_indices = @transform_2, window_bounds = array<i64: 1, 32>}, {transform_indices = @transform_3, window_bounds = array<i64: 1, 64, 32>}]} {
    %0 = arith.index_cast %arg0 : i32 to index
    %1 = memref.load %arg2[%0] : memref<3xi32, #tpu.memory_space<smem>>
    %c0 = arith.constant 0 : index
    %c0_0 = arith.constant 0 : index
    %c0_1 = arith.constant 0 : index
    %2 = vector.load %arg3[%c0, %c0_0, %c0_1] : memref<1x64x32xf32, #tpu.memory_space<vmem>>, vector<1x64x32xf32>
    %3 = vector.shape_cast %2 : vector<1x64x32xf32> to vector<64x32xf32>
    %4 = arith.index_cast %1 : i32 to index
    %c0_2 = arith.constant 0 : index
    %c0_3 = arith.constant 0 : index
    %5 = vector.load %arg4[%4, %c0_2, %c0_3] : memref<4x32x32xf32, #tpu.memory_space<vmem>>, vector<1x32x32xf32>
    %6 = vector.shape_cast %5 : vector<1x32x32xf32> to vector<32x32xf32>
    %cst = arith.constant dense<0.000000e+00> : vector<64x32xf32>
    %7 = tpu.matmul %3, %6, %cst {dimension_numbers = #tpu.dot_dimension_numbers<[1], [0], [0], [1], [0, 0, 1, 1], [], []>} : vector<64x32xf32>, vector<32x32xf32>, vector<64x32xf32> -> vector<64x32xf32>
    %c0_4 = arith.constant 0 : index
    %c0_5 = arith.constant 0 : index
    %8 = vector.load %arg5[%c0_4, %c0_5] : memref<1x32xf32, #tpu.memory_space<vmem>>, vector<1x32xf32>
    %9 = vector.broadcast %8 : vector<1x32xf32> to vector<64x32xf32>
    %10 = arith.addf %7, %9 : vector<64x32xf32>
    %cst_6 = arith.constant 3.000000e+01 : f32
    %11 = vector.broadcast %cst_6 : f32 to vector<64x32xf32>
    %12 = arith.mulf %11, %10 : vector<64x32xf32>
    %13 = math.sin %12 : vector<64x32xf32>
    %c0_7 = arith.constant 0 : index
    %c0_8 = arith.constant 0 : index
    %c0_9 = arith.constant 0 : index
    %14 = vector.load %arg6[%c0_7, %c0_8, %c0_9] : memref<1x64x32xf32, #tpu.memory_space<vmem>>, vector<1x64x32xf32>
    %15 = vector.shape_cast %14 : vector<1x64x32xf32> to vector<64x32xf32>
    %16 = vector.shape_cast %13 : vector<64x32xf32> to vector<1x64x32xf32>
    tpu.vector_store %arg6[%c0_7, %c0_8, %c0_9], %16 {strides = array<i32>} : memref<1x64x32xf32, #tpu.memory_space<vmem>>, vector<1x64x32xf32>,
    return
  }
  func.func @transform_0(%arg0: i32, %arg1: i32, %arg2: memref<3xi32, #tpu.memory_space<smem>>) -> (i32, i32, i32) {
    %c0_i32 = arith.constant 0 : i32
    %c0_i32_0 = arith.constant 0 : i32
    return %arg0, %arg1, %c0_i32 : i32, i32, i32
  }
  func.func @transform_1(%arg0: i32, %arg1: i32, %arg2: memref<3xi32, #tpu.memory_space<smem>>) -> (i32, i32, i32) {
    %c0_i32 = arith.constant 0 : i32
    %c0_i32_0 = arith.constant 0 : i32
    %c0_i32_1 = arith.constant 0 : i32
    %c0_i32_2 = arith.constant 0 : i32
    return %c0_i32, %c0_i32_0, %c0_i32_1 : i32, i32, i32
  }
  func.func @transform_2(%arg0: i32, %arg1: i32, %arg2: memref<3xi32, #tpu.memory_space<smem>>) -> (i32, i32) {
    %c0_i32 = arith.constant 0 : i32
    %c0_i32_0 = arith.constant 0 : i32
    %c0_i32_1 = arith.constant 0 : i32
    return %c0_i32, %c0_i32_0 : i32, i32
  }
  func.func @transform_3(%arg0: i32, %arg1: i32, %arg2: memref<3xi32, #tpu.memory_space<smem>>) -> (i32, i32, i32) {
    %c0_i32 = arith.constant 0 : i32
    %c0_i32_0 = arith.constant 0 : i32
    return %arg0, %arg1, %c0_i32 : i32, i32, i32
  }
}

</mosaic_0001>

<llo_original>
// kernel: tpu_custom_call.1
$region0: #{tpu_custom_call.1}
  #allocation0 [shape = 'u32[]', space=smem, size = 0x4, offset = 0x4, fixed_abs, tag = 'smem constant byte address 0x4 - core index']
  #allocation1 [shape = 'u32[72,128]{1,0:T(1,128)}', space=vmem, size = 0x9000, scoped, tag = 'internal scratch']
  #allocation2 [shape = 's32[1]{0}', space=sflag, size = 0x4, scoped, tag = 'scoped memory for tpu_custom_call.1']
  #allocation3 [shape = 'u8[512]{0}', space=smem, size = 0x200, scoped, tag = 'prefetched SMEM operand 0']
  %s0 = inlined_call_operand.vmem [shape: s32[3], index: 0, kind: input, shape index: {}]
  %s1 = inlined_call_operand.vmem [shape: f32[3,64,32], index: 1, kind: input, shape index: {}]
  %s2 = inlined_call_operand.vmem [shape: f32[4,32,32], index: 2, kind: input, shape index: {}]
  %s3 = inlined_call_operand.vmem [shape: f32[1,32], index: 3, kind: input, shape index: {}]
  %s4 = inlined_call_operand.vmem [shape: f32[3,64,32], index: 4, kind: output, shape index: {}]
  %s5 = sld [smem:[#allocation0]]
  $region45: #{tpu_custom_call.1} parent=0
    _
  %s7 = ssub.s32 1, %s5
  %s8 = scalar_select 0, %s7, %s5
  %s10 = sshll.u32 %s0, 4
  %s11 = int_to_ptr.vmem [resolvable:$true] %s10
  %13 = dma.vmem_to_smem %s11, 16, [#allocation3], [#allocation2]
  %15 = dma.done [#allocation2], 16
  %16 = sfence
  loop: start=0, step=1, limit=5
  $region2: #{tpu_custom_call.1} parent=0 // loop_pre_header
    _
  $region3: #{tpu_custom_call.1} parent=0 // loop_header
    %s18 = sphi 0, %s22
    %p19 = scmp.ge.s32.totalorder %s18, 5
    %s25 = sphi 0, %s37
    %s26 = sphi 0, %s33
    %s27 = sphi 0, %s25
    %s28 = sphi 0, %s26
    %s29 = sphi 0, %s27
    %s30 = sphi 0, %s28
    %s42 = sphi 0, %s44
    %s45 = sphi 0, %s42
    %s46 = sphi 0, %s45
    %s62 = sphi 0, %s46
    %s66 = sphi 0, %s66
    %s68 = sphi 0, %s66
    %s69 = sphi 0, %s68
    %s83 = sphi 0, %s69
    %s87 = sphi 0, %s87
    %s89 = sphi 0, %s87
    %s90 = sphi 0, %s89
    %s104 = sphi 0, %s90
    %s112 = sphi 0, %s114
    %s115 = sphi 0, %s112
    %s116 = sphi 0, %s115
    %s132 = sphi 0, %s116
  $region4: #{tpu_custom_call.1} parent=0 // loop_header_branch
    %21 = sbr.rel (%p19) target = $region8
  $region5: #{tpu_custom_call.1} parent=0 // loop_body
    %s23 = ssub.s32 %s18, 1
    %s24 = ssub.s32 %s18, 2
    %s31 = sadd.s32 1, %s26
    %p32 = scmp.ge.s32.totalorder %s31, 1
    %s33 = scalar_select %p32, 0, %s31
    %s34 = sadd.s32 1, %s25
    %s35 = scalar_select %p32, %s34, %s25
    %p36 = scmp.ge.s32.totalorder %s35, 3
    %s37 = scalar_select %p36, 0, %s35
    %s38 = ssub.s32 %s25, %s37
    %s39 = ssub.s32 %s26, %s33
    %s40 = sor.u32 %s38, %s39
    %p41 = scmp.eq.s32.totalorder %s40, 0
    %s43 = sadd.s32 %s42, 1
    %s44 = scalar_select %p41, %s42, %s43
    %p47 = pneg %p41
    %p48 = scmp.eq.s32.totalorder %s18, 2
    %p49 = por %p47, %p48
    %p50 = scmp.ne.s32.totalorder %s42, %s45
    %p51 = scmp.eq.s32.totalorder %s18, 0
    %p52 = por %p50, %p51
    %p53 = scmp.ne.s32.totalorder %s42, %s45
    %p54 = scmp.eq.s32.totalorder %s23, 2
    %p55 = por %p53, %p54
    %p56 = scmp.ne.s32.totalorder %s45, %s46
    %p57 = scmp.eq.s32.totalorder %s23, 0
    %p58 = por %p56, %p57
    %p59 = scmp.ne.s32.totalorder %s45, %s46
    %p60 = scmp.eq.s32.totalorder %s24, 2
    %p61 = por %p59, %p60
    %p63 = scmp.ne.s32.totalorder %s46, %s62
    %p64 = scmp.eq.s32.totalorder %s24, 0
    %p65 = por %p63, %p64
    %s67 = sadd.s32 %s66, 1
    %p70 = scmp.eq.s32.totalorder %s18, 2
    %p71 = scmp.ne.s32.totalorder %s66, %s68
    %p72 = scmp.eq.s32.totalorder %s18, 0
    %p73 = por %p71, %p72
    %p74 = scmp.ne.s32.totalorder %s66, %s68
    %p75 = scmp.eq.s32.totalorder %s23, 2
    %p76 = por %p74, %p75
    %p77 = scmp.ne.s32.totalorder %s68, %s69
    %p78 = scmp.eq.s32.totalorder %s23, 0
    %p79 = por %p77, %p78
    %p80 = scmp.ne.s32.totalorder %s68, %s69
    %p81 = scmp.eq.s32.totalorder %s24, 2
    %p82 = por %p80, %p81
    %p84 = scmp.ne.s32.totalorder %s69, %s83
    %p85 = scmp.eq.s32.totalorder %s24, 0
    %p86 = por %p84, %p85
    %s88 = sadd.s32 %s87, 1
    %p91 = scmp.eq.s32.totalorder %s18, 2
    %p92 = scmp.ne.s32.totalorder %s87, %s89
    %p93 = scmp.eq.s32.totalorder %s18, 0
    %p94 = por %p92, %p93
    %p95 = scmp.ne.s32.totalorder %s87, %s89
    %p96 = scmp.eq.s32.totalorder %s23, 2
    %p97 = por %p95, %p96
    %p98 = scmp.ne.s32.totalorder %s89, %s90
    %p99 = scmp.eq.s32.totalorder %s23, 0
    %p100 = por %p98, %p99
    %p101 = scmp.ne.s32.totalorder %s89, %s90
    %p102 = scmp.eq.s32.totalorder %s24, 2
    %p103 = por %p101, %p102
    %p105 = scmp.ne.s32.totalorder %s90, %s104
    %p106 = scmp.eq.s32.totalorder %s24, 0
    %p107 = por %p105, %p106
    %s108 = ssub.s32 %s25, %s37
    %s109 = ssub.s32 %s26, %s33
    %s110 = sor.u32 %s108, %s109
    %p111 = scmp.eq.s32.totalorder %s110, 0
    %s113 = sadd.s32 %s112, 1
    %s114 = scalar_select %p111, %s112, %s113
    %p117 = pneg %p111
    %p118 = scmp.eq.s32.totalorder %s18, 2
    %p119 = por %p117, %p118
    %p120 = scmp.ne.s32.totalorder %s112, %s115
    %p121 = scmp.eq.s32.totalorder %s18, 0
    %p122 = por %p120, %p121
    %p123 = scmp.ne.s32.totalorder %s112, %s115
    %p124 = scmp.eq.s32.totalorder %s23, 2
    %p125 = por %p123, %p124
    %p126 = scmp.ne.s32.totalorder %s115, %s116
    %p127 = scmp.eq.s32.totalorder %s23, 0
    %p128 = por %p126, %p127
    %p129 = scmp.ne.s32.totalorder %s115, %s116
    %p130 = scmp.eq.s32.totalorder %s24, 2
    %p131 = por %p129, %p130
    %p133 = scmp.ne.s32.totalorder %s116, %s132
    %p134 = scmp.eq.s32.totalorder %s24, 0
    %p135 = por %p133, %p134
    %p136 = scmp.le.s32.totalorder 1, %s18
    %p137 = scmp.lt.s32.totalorder %s18, 4
    %p138 = pnand %p136, %p137
    %p139 = pneg %p138
    // Predicated region
    $region9: #{tpu_custom_call.1} parent=5 // pred_check
      _
    $region10: #{tpu_custom_call.1} parent=5 // pred_check_branch
      %141 = sbr.rel (%p138) target = $region12
    $region11: #{tpu_custom_call.1} parent=5 // pred_region
      %s142 = ssub.s32 %s18, 1
      // Predicated region
      $region13: #{tpu_custom_call.1} parent=11 // pred_check
        %p143 = pneg %p79
      $region14: #{tpu_custom_call.1} parent=11 // pred_check_branch
        %145 = sbr.rel (%p143) target = $region16
      $region15: #{tpu_custom_call.1} parent=11 // pred_region
        _
      $region16: #{tpu_custom_call.1} parent=11 // pred_fallthru
        _
      // Predicated region
      $region17: #{tpu_custom_call.1} parent=11 // pred_check
        %p146 = pneg %p100
      $region18: #{tpu_custom_call.1} parent=11 // pred_check_branch
        %148 = sbr.rel (%p146) target = $region20
      $region19: #{tpu_custom_call.1} parent=11 // pred_region
        _
      $region20: #{tpu_custom_call.1} parent=11 // pred_fallthru
        _
    $region12: #{tpu_custom_call.1} parent=5 // pred_fallthru
      _
    %p149 = scmp.lt.s32.totalorder %s18, 3
    // Predicated region
    $region21: #{tpu_custom_call.1} parent=5 // pred_check
      %p150 = pneg %p149
    $region22: #{tpu_custom_call.1} parent=5 // pred_check_branch
      %152 = sbr.rel (%p150) target = $region24
    $region23: #{tpu_custom_call.1} parent=5 // pred_region
      // Predicated region
      $region25: #{tpu_custom_call.1} parent=23 // pred_check
        %p153 = pneg %p52
      $region26: #{tpu_custom_call.1} parent=23 // pred_check_branch
        %155 = sbr.rel (%p153) target = $region28
      $region27: #{tpu_custom_call.1} parent=23 // pred_region
        %s156 = smul.u32 8, %s26
        %p157 = scmp.lt.s32.totalorder %s25, 2
        %s158 = scalar_select %p157, %s25, 2
        %p159 = scmp.lt.s32.totalorder %s156, 7
        %s160 = scalar_select %p159, %s156, 7
        %s161 = smul.addr %s158, 8
        %s162 = sadd.s32 %s160, %s161
        %s163 = smul.addr %s162, 8
        %s164 = scalar_lea.vmem %s1, %s163
        %s165 = smul.u32 8, %s26
      $region28: #{tpu_custom_call.1} parent=23 // pred_fallthru
        _
    $region24: #{tpu_custom_call.1} parent=5 // pred_fallthru
      _
    %p166 = scmp.le.s32.totalorder 1, %s18
    %p167 = scmp.lt.s32.totalorder %s18, 4
    %p168 = pnand %p166, %p167
    %p169 = pneg %p168
    // Predicated region
    $region29: #{tpu_custom_call.1} parent=5 // pred_check
      _
    $region30: #{tpu_custom_call.1} parent=5 // pred_check_branch
      %171 = sbr.rel (%p168) target = $region32
    $region31: #{tpu_custom_call.1} parent=5 // pred_region
      %s172 = ssub.s32 %s18, 1
      %s173 = smul.u32 8, %s28
      %p174 = scmp.lt.s32.totalorder %s27, 2
      %s175 = scalar_select %p174, %s27, 2
      %p176 = scmp.lt.s32.totalorder %s173, 7
      %s177 = scalar_select %p176, %s173, 7
      %s178 = smul.addr %s175, 8
      %s179 = sadd.s32 %s177, %s178
      %s180 = smul.addr %s179, 8
      %s181 = scalar_lea.vmem %s1, %s180
      %p182 = pneg %p58
      %p183 = pneg %p55
      %p184 = pneg %p79
      %p185 = pneg %p76
      %p186 = pneg %p100
      %p187 = pneg %p97
      %p188 = pneg %p128
      %p189 = pneg %p125
      %s190 = smul.u32 8, %s28
      %p191 = scmp.lt.s32.totalorder %s27, 2
      %s192 = scalar_select %p191, %s27, 2
      %p193 = scmp.lt.s32.totalorder %s190, 7
      %s194 = scalar_select %p193, %s190, 7
      %s195 = smul.addr %s192, 8
      %s196 = sadd.s32 %s194, %s195
      %s197 = smul.addr %s196, 8
      %s198 = scalar_lea.vmem %s4, %s197
      %s199 = smul.u32 8, %s28
      %p200 = scmp.lt.s32.totalorder %s27, 2
      %s201 = scalar_select %p200, %s27, 2
      %p202 = scmp.lt.s32.totalorder %s199, 7
      %s203 = scalar_select %p202, %s199, 7
      %s204 = smul.addr %s201, 8
      %s205 = sadd.s32 %s203, %s204
      %s206 = smul.addr %s205, 8
      %s207 = scalar_lea.vmem %s1, %s206
      %s208 = smul.u32 8, %s28
      %s209 = smul.u32 8, %s28
      %p210 = scmp.lt.s32.totalorder %s27, 2
      %s211 = scalar_select %p210, %s27, 2
      %p212 = scmp.lt.s32.totalorder %s209, 7
      %s213 = scalar_select %p212, %s209, 7
      %s214 = smul.addr %s211, 8
      %s215 = sadd.s32 %s213, %s214
      %s216 = smul.addr %s215, 8
      %s217 = scalar_lea.vmem %s4, %s216
      %s218 = smul.u32 8, %s28
      %s219 = sld [smem:[#allocation3 + %s27]]
      %v220 = vld [vmem:[%s207] sm:$0xff]
      %v221 = vld [vmem:[%s207 + $0x8] sm:$0xff]
      %v222 = vld [vmem:[%s207 + $0x10] sm:$0xff]
      %v223 = vld [vmem:[%s207 + $0x18] sm:$0xff]
      %v224 = vld [vmem:[%s207 + $0x20] sm:$0xff]
      %v225 = vld [vmem:[%s207 + $0x28] sm:$0xff]
      %v226 = vld [vmem:[%s207 + $0x30] sm:$0xff]
      %v227 = vld [vmem:[%s207 + $0x38] sm:$0xff]
      %s228 = smul.u32 %s219, 32
      %s229 = scalar_lea.vmem %s2, %s228
      %v230 = vld [vmem:[%s229] sm:$0xff]
      %v231 = vld [vmem:[%s229 + $0x8] sm:$0xff]
      %v232 = vld [vmem:[%s229 + $0x10] sm:$0xff]
      %v233 = vld [vmem:[%s229 + $0x18] sm:$0xff]
      %v234 = vld [vmem:[%s3] sm:$0x1]
      %v236 = vperm.slane %v234, 0
      %vm238 = vcmask 261120
      %v240 = vsel %vm238, %v220, 0
      %v243 = vsel %vm238, %v221, 0
      %v246 = vsel %vm238, %v222, 0
      %v249 = vsel %vm238, %v223, 0
      %v252 = vsel %vm238, %v224, 0
      %v255 = vsel %vm238, %v225, 0
      %v258 = vsel %vm238, %v226, 0
      %v261 = vsel %vm238, %v227, 0
      %263 = vmatpush.msra.mxu0 0.0
      %264 = vmatpush.msra.mxu0 0.0
      %265 = vmatpush.msra.mxu0 0.0
      %266 = vmatpush.msra.mxu0 0.0
      %267 = vmatpush.msra.mxu0 0.0
      %268 = vmatpush.msra.mxu0 0.0
      %269 = vmatpush.msra.mxu0 0.0
      %270 = vmatpush.msra.mxu0 0.0
      %271 = vmatpush.msra.mxu0 0.0
      %272 = vmatpush.msra.mxu0 0.0
      %273 = vmatpush.msra.mxu0 0.0
      %274 = vmatpush.msra.mxu0 0.0
      %275 = vmatpush.msra.mxu0 %v233
      %276 = vmatpush.msra.mxu0 %v232
      %277 = vmatpush.msra.mxu0 %v231
      %278 = vmatpush.msra.mxu0 %v230
      %279 = vmatmul.f32.gmra.mxu0 %v240
      %v280 = vpop.f32.mrf.mxu0
      %v281 = vadd.f32 %v236, %v280
      %282 = vmatmul.f32.gmra.mxu0 %v243
      %v283 = vpop.f32.mrf.mxu0
      %v284 = vadd.f32 %v236, %v283
      %285 = vmatmul.f32.gmra.mxu0 %v246
      %v286 = vpop.f32.mrf.mxu0
      %v287 = vadd.f32 %v236, %v286
      %288 = vmatmul.f32.gmra.mxu0 %v249
      %v289 = vpop.f32.mrf.mxu0
      %v290 = vadd.f32 %v236, %v289
      %291 = vmatmul.f32.gmra.mxu0 %v252
      %v292 = vpop.f32.mrf.mxu0
      %v293 = vadd.f32 %v236, %v292
      %294 = vmatmul.f32.gmra.mxu0 %v255
      %v295 = vpop.f32.mrf.mxu0
      %v296 = vadd.f32 %v236, %v295
      %297 = vmatmul.f32.gmra.mxu0 %v258
      %v298 = vpop.f32.mrf.mxu0
      %v299 = vadd.f32 %v236, %v298
      %300 = vmatmul.f32.gmra.mxu0 %v261
      %v301 = vpop.f32.mrf.mxu0
      %v302 = vadd.f32 %v236, %v301
      %303 = vdwg.mxu0
      %v304 = vmul.f32 %v281, 30.0
      %v305 = vmul.f32 %v284, 30.0
      %v306 = vmul.f32 %v287, 30.0
      %v307 = vmul.f32 %v290, 30.0
      %v308 = vmul.f32 %v293, 30.0
      %v309 = vmul.f32 %v296, 30.0
      %v310 = vmul.f32 %v299, 30.0
      %v311 = vmul.f32 %v302, 30.0
      %v312 = vand.u32 2147483647, %v304
      %vm313 = vcmp.le.f32.partialorder %v312, 0.7853982
      %vm314 = vcmp.lt.s32.totalorder %v304, 0
      %v315 = vand.u32 %v304, 2139095040
      %v316 = vshrl.u32 %v315, 23
      %v317 = vsub.s32 %v316, 127
      %v318 = vand.u32 2147483647, %v304
      %v319 = vand.u32 %v318, 8388607
      %v320 = vor.u32 %v319, 8388608
      %v321 = vsub.s32 0, %v320
      %v322 = vadd.s32 %v317, 1
      %vm323 = vcmp.gt.s32.totalorder %v322, 0
      %v324 = vsel %vm323, %v322, 0
      %v325 = vshrl.u32 %v324, 5
      %v326 = vand.u32 %v324, 31
      %v327 = vsub.s32 32, %v326
      %v328 = vshrl.u32 683565275, %v327
      %v329 = vshll.u32 683565275, %v326
      %v330 = vshrl.u32 2475754826, %v327
      %v331 = vor.u32 %v329, %v330
      %v332 = vshll.u32 2475754826, %v326
      %v333 = vshrl.u32 2131351028, %v327
      %v334 = vor.u32 %v332, %v333
      %v335 = vshll.u32 2131351028, %v326
      %v336 = vshrl.u32 2102212464, %v327
      %v337 = vor.u32 %v335, %v336
      %v338 = vshll.u32 2102212464, %v326
      %v339 = vshrl.u32 920167782, %v327
      %v340 = vor.u32 %v338, %v339
      %v341 = vshll.u32 920167782, %v326
      %v342 = vshrl.u32 1326507024, %v327
      %v343 = vor.u32 %v341, %v342
      %vm344 = vcmp.lt.s32.totalorder %v325, 1
      %vm345 = vcmp.lt.s32.totalorder %v325, 2
      %vm346 = vcmp.lt.s32.totalorder %v325, 3
      %vm347 = vcmp.lt.s32.totalorder %v325, 4
      %v348 = vsel %vm344, %v328, %v331
      %v349 = vsel %vm347, %v337, 2102212464
      %v350 = vsel %vm346, %v334, %v349
      %v351 = vsel %vm345, %v348, %v350
      %v352 = vsel %vm344, %v331, %v334
      %v353 = vsel %vm347, %v340, 920167782
      %v354 = vsel %vm346, %v337, %v353
      %v355 = vsel %vm345, %v352, %v354
      %v356 = vsel %vm344, %v334, %v337
      %v357 = vsel %vm347, %v343, 1326507024
      %v358 = vsel %vm346, %v340, %v357
      %v359 = vsel %vm345, %v356, %v358
      %v360 = vshll.u32 %v320, 8
      %v361 = vand.u32 %v360, 65535
      %v362 = vshrl.u32 %v360, 16
      %v363 = vand.u32 %v359, 65535
      %v364 = vshrl.u32 %v359, 16
      %v365 = vmul.u32 %v361, %v363
      %v366 = vmul.u32 %v361, %v364
      %v367 = vmul.u32 %v362, %v363
      %v368 = vmul.u32 %v362, %v364
      %v369 = vshll.u32 %v366, 16
      %v370 = vshrl.u32 %v366, 16
      %v371 = vshll.u32 %v367, 16
      %v372 = vshrl.u32 %v367, 16
      %vm373 = vc.u32 %v365, %v369
      %v374 = vsel %vm373, 1, 0
      %v375 = vadd.s32 %v365, %v369
      %v376 = vadd.s32 %v368, %v374
      %vm377 = vc.u32 %v375, %v371
      %v378 = vsel %vm377, 1, 0
      %v379 = vadd.s32 %v375, %v371
      %v380 = vadd.s32 %v376, %v378
      %v381 = vadd.s32 %v380, %v370
      %v382 = vadd.s32 %v381, %v372
      %v383 = vand.u32 %v360, 65535
      %v384 = vshrl.u32 %v360, 16
      %v385 = vand.u32 %v355, 65535
      %v386 = vshrl.u32 %v355, 16
      %v387 = vmul.u32 %v383, %v385
      %v388 = vmul.u32 %v383, %v386
      %v389 = vmul.u32 %v384, %v385
      %v390 = vmul.u32 %v384, %v386
      %v391 = vshll.u32 %v388, 16
      %v392 = vshrl.u32 %v388, 16
      %v393 = vshll.u32 %v389, 16
      %v394 = vshrl.u32 %v389, 16
      %vm395 = vc.u32 %v387, %v391
      %v396 = vsel %vm395, 1, 0
      %v397 = vadd.s32 %v387, %v391
      %v398 = vadd.s32 %v390, %v396
      %vm399 = vc.u32 %v397, %v393
      %v400 = vsel %vm399, 1, 0
      %v401 = vadd.s32 %v397, %v393
      %v402 = vadd.s32 %v398, %v400
      %v403 = vadd.s32 %v402, %v392
      %v404 = vadd.s32 %v403, %v394
      %v405 = vmul.u32 %v360, %v351
      %v406 = vadd.s32 %v382, %v401
      %vm407 = vc.u32 %v382, %v401
      %v408 = vadd.s32 %v404, 1
      %v409 = vsel %vm407, %v408, %v404
      %v410 = vadd.s32 %v405, %v409
      %v411 = vadd.s32 %v410, 536870912
      %v412 = vshrl.u32 %v411, 30
      %v413 = vshll.u32 %v412, 30
      %v414 = vsub.s32 %v410, %v413
      %vm415 = vcmp.lt.s32.totalorder %v414, 0
      %v416 = vsub.s32 0, %v414
      %v417 = vsel %vm415, %v416, %v414
      %v418 = vclz %v417
      %v419 = vsub.s32 %v418, 2
      %vm420 = vcmp.gt.s32.totalorder 0, %v419
      %v421 = vsel %vm420, 0, %v419
      %v422 = vsub.s32 32, %v421
      %v423 = vshll.u32 %v414, %v421
      %v424 = vshrl.u32 %v406, %v422
      %v425 = vor.u32 %v423, %v424
      %v426 = vsub.s32 4294967266, %v421
      %v427 = vadd.s32 %v426, 127
      %v428 = vshll.u32 %v427, 23
      %v429 = vor.u32 4788187, %v428
      %v430 = vand.u32 2147483647, %v429
      %v432 = vcvt.s32.f32 %v425
      %v433 = vmul.f32 %v432, %v430
      %v434 = vxor.u32 %v433, 2147483648
      %v435 = vsel %vm314, %v434, %v433
      %v436 = vsub.s32 4, %v412
      %v437 = vsel %vm314, %v436, %v412
      %v438 = vsel %vm313, %v304, %v435
      %v439 = vsel %vm313, 0, %v437
      %v440 = vmul.f32 %v438, %v438
      %v441 = vmul.f32 %v440, -0.001358992
      %v442 = vadd.f32 %v441, 0.041655596
      %v443 = vmul.f32 %v440, %v442
      %v444 = vadd.f32 %v443, -0.4999988
      %v445 = vmul.f32 %v440, %v444
      %v446 = vadd.f32 1.0, %v445
      %v447 = vmul.f32 %v438, %v438
      %v448 = vmul.f32 %v447, -0.00019511016
      %v449 = vadd.f32 %v448, 0.008332121
      %v450 = vmul.f32 %v447, %v449
      %v451 = vadd.f32 %v450, -0.16666654
      %v452 = vmul.f32 %v447, %v451
      %v453 = vadd.f32 %v452, 1.0
      %v454 = vmul.f32 %v453, %v438
      %vm455 = vweird.f32 %v304
      %v456 = vadd.s32 %v439, 3
      %v457 = vand.u32 %v456, 3
      %vm458 = vcmp.lt.s32.totalorder %v457, 2
      %vm459 = vcmp.eq.s32.totalorder %v457, 0
      %v460 = vxor.u32 %v454, 2147483648
      %v461 = vsel %vm459, %v446, %v460
      %vm462 = vcmp.eq.s32.totalorder %v457, 2
      %v463 = vxor.u32 %v446, 2147483648
      %v464 = vsel %vm462, %v463, %v454
      %v465 = vsel %vm458, %v461, %v464
      %v466 = vsel %vm455, nan, %v465
      %v467 = vand.u32 2147483647, %v305
      %vm468 = vcmp.le.f32.partialorder %v467, 0.7853982
      %vm469 = vcmp.lt.s32.totalorder %v305, 0
      %v470 = vand.u32 %v305, 2139095040
      %v471 = vshrl.u32 %v470, 23
      %v472 = vsub.s32 %v471, 127
      %v473 = vand.u32 2147483647, %v305
      %v474 = vand.u32 %v473, 8388607
      %v475 = vor.u32 %v474, 8388608
      %v476 = vsub.s32 0, %v475
      %v477 = vadd.s32 %v472, 1
      %vm478 = vcmp.gt.s32.totalorder %v477, 0
      %v479 = vsel %vm478, %v477, 0
      %v480 = vshrl.u32 %v479, 5
      %v481 = vand.u32 %v479, 31
      %v482 = vsub.s32 32, %v481
      %v483 = vshrl.u32 683565275, %v482
      %v484 = vshll.u32 683565275, %v481
      %v485 = vshrl.u32 2475754826, %v482
      %v486 = vor.u32 %v484, %v485
      %v487 = vshll.u32 2475754826, %v481
      %v488 = vshrl.u32 2131351028, %v482
      %v489 = vor.u32 %v487, %v488
      %v490 = vshll.u32 2131351028, %v481
      %v491 = vshrl.u32 2102212464, %v482
      %v492 = vor.u32 %v490, %v491
      %v493 = vshll.u32 2102212464, %v481
      %v494 = vshrl.u32 920167782, %v482
      %v495 = vor.u32 %v493, %v494
      %v496 = vshll.u32 920167782, %v481
      %v497 = vshrl.u32 1326507024, %v482
      %v498 = vor.u32 %v496, %v497
      %vm499 = vcmp.lt.s32.totalorder %v480, 1
      %vm500 = vcmp.lt.s32.totalorder %v480, 2
      %vm501 = vcmp.lt.s32.totalorder %v480, 3
      %vm502 = vcmp.lt.s32.totalorder %v480, 4
      %v503 = vsel %vm499, %v483, %v486
      %v504 = vsel %vm502, %v492, 2102212464
      %v505 = vsel %vm501, %v489, %v504
      %v506 = vsel %vm500, %v503, %v505
      %v507 = vsel %vm499, %v486, %v489
      %v508 = vsel %vm502, %v495, 920167782
      %v509 = vsel %vm501, %v492, %v508
      %v510 = vsel %vm500, %v507, %v509
      %v511 = vsel %vm499, %v489, %v492
      %v512 = vsel %vm502, %v498, 1326507024
      %v513 = vsel %vm501, %v495, %v512
      %v514 = vsel %vm500, %v511, %v513
      %v515 = vshll.u32 %v475, 8
      %v516 = vand.u32 %v515, 65535
      %v517 = vshrl.u32 %v515, 16
      %v518 = vand.u32 %v514, 65535
      %v519 = vshrl.u32 %v514, 16
      %v520 = vmul.u32 %v516, %v518
      %v521 = vmul.u32 %v516, %v519
      %v522 = vmul.u32 %v517, %v518
      %v523 = vmul.u32 %v517, %v519
      %v524 = vshll.u32 %v521, 16
      %v525 = vshrl.u32 %v521, 16
      %v526 = vshll.u32 %v522, 16
      %v527 = vshrl.u32 %v522, 16
      %vm528 = vc.u32 %v520, %v524
      %v529 = vsel %vm528, 1, 0
      %v530 = vadd.s32 %v520, %v524
      %v531 = vadd.s32 %v523, %v529
      %vm532 = vc.u32 %v530, %v526
      %v533 = vsel %vm532, 1, 0
      %v534 = vadd.s32 %v530, %v526
      %v535 = vadd.s32 %v531, %v533
      %v536 = vadd.s32 %v535, %v525
      %v537 = vadd.s32 %v536, %v527
      %v538 = vand.u32 %v515, 65535
      %v539 = vshrl.u32 %v515, 16
      %v540 = vand.u32 %v510, 65535
      %v541 = vshrl.u32 %v510, 16
      %v542 = vmul.u32 %v538, %v540
      %v543 = vmul.u32 %v538, %v541
      %v544 = vmul.u32 %v539, %v540
      %v545 = vmul.u32 %v539, %v541
      %v546 = vshll.u32 %v543, 16
      %v547 = vshrl.u32 %v543, 16
      %v548 = vshll.u32 %v544, 16
      %v549 = vshrl.u32 %v544, 16
      %vm550 = vc.u32 %v542, %v546
      %v551 = vsel %vm550, 1, 0
      %v552 = vadd.s32 %v542, %v546
      %v553 = vadd.s32 %v545, %v551
      %vm554 = vc.u32 %v552, %v548
      %v555 = vsel %vm554, 1, 0
      %v556 = vadd.s32 %v552, %v548
      %v557 = vadd.s32 %v553, %v555
      %v558 = vadd.s32 %v557, %v547
      %v559 = vadd.s32 %v558, %v549
      %v560 = vmul.u32 %v515, %v506
      %v561 = vadd.s32 %v537, %v556
      %vm562 = vc.u32 %v537, %v556
      %v563 = vadd.s32 %v559, 1
      %v564 = vsel %vm562, %v563, %v559
      %v565 = vadd.s32 %v560, %v564
      %v566 = vadd.s32 %v565, 536870912
      %v567 = vshrl.u32 %v566, 30
      %v568 = vshll.u32 %v567, 30
      %v569 = vsub.s32 %v565, %v568
      %vm570 = vcmp.lt.s32.totalorder %v569, 0
      %v571 = vsub.s32 0, %v569
      %v572 = vsel %vm570, %v571, %v569
      %v573 = vclz %v572
      %v574 = vsub.s32 %v573, 2
      %vm575 = vcmp.gt.s32.totalorder 0, %v574
      %v576 = vsel %vm575, 0, %v574
      %v577 = vsub.s32 32, %v576
      %v578 = vshll.u32 %v569, %v576
      %v579 = vshrl.u32 %v561, %v577
      %v580 = vor.u32 %v578, %v579
      %v581 = vsub.s32 4294967266, %v576
      %v582 = vadd.s32 %v581, 127
      %v583 = vshll.u32 %v582, 23
      %v584 = vor.u32 4788187, %v583
      %v585 = vand.u32 2147483647, %v584
      %v587 = vcvt.s32.f32 %v580
      %v588 = vmul.f32 %v587, %v585
      %v589 = vxor.u32 %v588, 2147483648
      %v590 = vsel %vm469, %v589, %v588
      %v591 = vsub.s32 4, %v567
      %v592 = vsel %vm469, %v591, %v567
      %v593 = vsel %vm468, %v305, %v590
      %v594 = vsel %vm468, 0, %v592
      %v595 = vmul.f32 %v593, %v593
      %v596 = vmul.f32 %v595, -0.001358992
      %v597 = vadd.f32 %v596, 0.041655596
      %v598 = vmul.f32 %v595, %v597
      %v599 = vadd.f32 %v598, -0.4999988
      %v600 = vmul.f32 %v595, %v599
      %v601 = vadd.f32 1.0, %v600
      %v602 = vmul.f32 %v593, %v593
      %v603 = vmul.f32 %v602, -0.00019511016
      %v604 = vadd.f32 %v603, 0.008332121
      %v605 = vmul.f32 %v602, %v604
      %v606 = vadd.f32 %v605, -0.16666654
      %v607 = vmul.f32 %v602, %v606
      %v608 = vadd.f32 %v607, 1.0
      %v609 = vmul.f32 %v608, %v593
      %vm610 = vweird.f32 %v305
      %v611 = vadd.s32 %v594, 3
      %v612 = vand.u32 %v611, 3
      %vm613 = vcmp.lt.s32.totalorder %v612, 2
      %vm614 = vcmp.eq.s32.totalorder %v612, 0
      %v615 = vxor.u32 %v609, 2147483648
      %v616 = vsel %vm614, %v601, %v615
      %vm617 = vcmp.eq.s32.totalorder %v612, 2
      %v618 = vxor.u32 %v601, 2147483648
      %v619 = vsel %vm617, %v618, %v609
      %v620 = vsel %vm613, %v616, %v619
      %v621 = vsel %vm610, nan, %v620
      %v622 = vand.u32 2147483647, %v306
      %vm623 = vcmp.le.f32.partialorder %v622, 0.7853982
      %vm624 = vcmp.lt.s32.totalorder %v306, 0
      %v625 = vand.u32 %v306, 2139095040
      %v626 = vshrl.u32 %v625, 23
      %v627 = vsub.s32 %v626, 127
      %v628 = vand.u32 2147483647, %v306
      %v629 = vand.u32 %v628, 8388607
      %v630 = vor.u32 %v629, 8388608
      %v631 = vsub.s32 0, %v630
      %v632 = vadd.s32 %v627, 1
      %vm633 = vcmp.gt.s32.totalorder %v632, 0
      %v634 = vsel %vm633, %v632, 0
      %v635 = vshrl.u32 %v634, 5
      %v636 = vand.u32 %v634, 31
      %v637 = vsub.s32 32, %v636
      %v638 = vshrl.u32 683565275, %v637
      %v639 = vshll.u32 683565275, %v636
      %v640 = vshrl.u32 2475754826, %v637
      %v641 = vor.u32 %v639, %v640
      %v642 = vshll.u32 2475754826, %v636
      %v643 = vshrl.u32 2131351028, %v637
      %v644 = vor.u32 %v642, %v643
      %v645 = vshll.u32 2131351028, %v636
      %v646 = vshrl.u32 2102212464, %v637
      %v647 = vor.u32 %v645, %v646
      %v648 = vshll.u32 2102212464, %v636
      %v649 = vshrl.u32 920167782, %v637
      %v650 = vor.u32 %v648, %v649
      %v651 = vshll.u32 920167782, %v636
      %v652 = vshrl.u32 1326507024, %v637
      %v653 = vor.u32 %v651, %v652
      %vm654 = vcmp.lt.s32.totalorder %v635, 1
      %vm655 = vcmp.lt.s32.totalorder %v635, 2
      %vm656 = vcmp.lt.s32.totalorder %v635, 3
      %vm657 = vcmp.lt.s32.totalorder %v635, 4
      %v658 = vsel %vm654, %v638, %v641
      %v659 = vsel %vm657, %v647, 2102212464
      %v660 = vsel %vm656, %v644, %v659
      %v661 = vsel %vm655, %v658, %v660
      %v662 = vsel %vm654, %v641, %v644
      %v663 = vsel %vm657, %v650, 920167782
      %v664 = vsel %vm656, %v647, %v663
      %v665 = vsel %vm655, %v662, %v664
      %v666 = vsel %vm654, %v644, %v647
      %v667 = vsel %vm657, %v653, 1326507024
      %v668 = vsel %vm656, %v650, %v667
      %v669 = vsel %vm655, %v666, %v668
      %v670 = vshll.u32 %v630, 8
      %v671 = vand.u32 %v670, 65535
      %v672 = vshrl.u32 %v670, 16
      %v673 = vand.u32 %v669, 65535
      %v674 = vshrl.u32 %v669, 16
      %v675 = vmul.u32 %v671, %v673
      %v676 = vmul.u32 %v671, %v674
      %v677 = vmul.u32 %v672, %v673
      %v678 = vmul.u32 %v672, %v674
      %v679 = vshll.u32 %v676, 16
      %v680 = vshrl.u32 %v676, 16
      %v681 = vshll.u32 %v677, 16
      %v682 = vshrl.u32 %v677, 16
      %vm683 = vc.u32 %v675, %v679
      %v684 = vsel %vm683, 1, 0
      %v685 = vadd.s32 %v675, %v679
      %v686 = vadd.s32 %v678, %v684
      %vm687 = vc.u32 %v685, %v681
      %v688 = vsel %vm687, 1, 0
      %v689 = vadd.s32 %v685, %v681
      %v690 = vadd.s32 %v686, %v688
      %v691 = vadd.s32 %v690, %v680
      %v692 = vadd.s32 %v691, %v682
      %v693 = vand.u32 %v670, 65535
      %v694 = vshrl.u32 %v670, 16
      %v695 = vand.u32 %v665, 65535
      %v696 = vshrl.u32 %v665, 16
      %v697 = vmul.u32 %v693, %v695
      %v698 = vmul.u32 %v693, %v696
      %v699 = vmul.u32 %v694, %v695
      %v700 = vmul.u32 %v694, %v696
      %v701 = vshll.u32 %v698, 16
      %v702 = vshrl.u32 %v698, 16
      %v703 = vshll.u32 %v699, 16
      %v704 = vshrl.u32 %v699, 16
      %vm705 = vc.u32 %v697, %v701
      %v706 = vsel %vm705, 1, 0
      %v707 = vadd.s32 %v697, %v701
      %v708 = vadd.s32 %v700, %v706
      %vm709 = vc.u32 %v707, %v703
      %v710 = vsel %vm709, 1, 0
      %v711 = vadd.s32 %v707, %v703
      %v712 = vadd.s32 %v708, %v710
      %v713 = vadd.s32 %v712, %v702
      %v714 = vadd.s32 %v713, %v704
      %v715 = vmul.u32 %v670, %v661
      %v716 = vadd.s32 %v692, %v711
      %vm717 = vc.u32 %v692, %v711
      %v718 = vadd.s32 %v714, 1
      %v719 = vsel %vm717, %v718, %v714
      %v720 = vadd.s32 %v715, %v719
      %v721 = vadd.s32 %v720, 536870912
      %v722 = vshrl.u32 %v721, 30
      %v723 = vshll.u32 %v722, 30
      %v724 = vsub.s32 %v720, %v723
      %vm725 = vcmp.lt.s32.totalorder %v724, 0
      %v726 = vsub.s32 0, %v724
      %v727 = vsel %vm725, %v726, %v724
      %v728 = vclz %v727
      %v729 = vsub.s32 %v728, 2
      %vm730 = vcmp.gt.s32.totalorder 0, %v729
      %v731 = vsel %vm730, 0, %v729
      %v732 = vsub.s32 32, %v731
      %v733 = vshll.u32 %v724, %v731
      %v734 = vshrl.u32 %v716, %v732
      %v735 = vor.u32 %v733, %v734
      %v736 = vsub.s32 4294967266, %v731
      %v737 = vadd.s32 %v736, 127
      %v738 = vshll.u32 %v737, 23
      %v739 = vor.u32 4788187, %v738
      %v740 = vand.u32 2147483647, %v739
      %v742 = vcvt.s32.f32 %v735
      %v743 = vmul.f32 %v742, %v740
      %v744 = vxor.u32 %v743, 2147483648
      %v745 = vsel %vm624, %v744, %v743
      %v746 = vsub.s32 4, %v722
      %v747 = vsel %vm624, %v746, %v722
      %v748 = vsel %vm623, %v306, %v745
      %v749 = vsel %vm623, 0, %v747
      %v750 = vmul.f32 %v748, %v748
      %v751 = vmul.f32 %v750, -0.001358992
      %v752 = vadd.f32 %v751, 0.041655596
      %v753 = vmul.f32 %v750, %v752
      %v754 = vadd.f32 %v753, -0.4999988
      %v755 = vmul.f32 %v750, %v754
      %v756 = vadd.f32 1.0, %v755
      %v757 = vmul.f32 %v748, %v748
      %v758 = vmul.f32 %v757, -0.00019511016
      %v759 = vadd.f32 %v758, 0.008332121
      %v760 = vmul.f32 %v757, %v759
      %v761 = vadd.f32 %v760, -0.16666654
      %v762 = vmul.f32 %v757, %v761
      %v763 = vadd.f32 %v762, 1.0
      %v764 = vmul.f32 %v763, %v748
      %vm765 = vweird.f32 %v306
      %v766 = vadd.s32 %v749, 3
      %v767 = vand.u32 %v766, 3
      %vm768 = vcmp.lt.s32.totalorder %v767, 2
      %vm769 = vcmp.eq.s32.totalorder %v767, 0
      %v770 = vxor.u32 %v764, 2147483648
      %v771 = vsel %vm769, %v756, %v770
      %vm772 = vcmp.eq.s32.totalorder %v767, 2
      %v773 = vxor.u32 %v756, 2147483648
      %v774 = vsel %vm772, %v773, %v764
      %v775 = vsel %vm768, %v771, %v774
      %v776 = vsel %vm765, nan, %v775
      %v777 = vand.u32 2147483647, %v307
      %vm778 = vcmp.le.f32.partialorder %v777, 0.7853982
      %vm779 = vcmp.lt.s32.totalorder %v307, 0
      %v780 = vand.u32 %v307, 2139095040
      %v781 = vshrl.u32 %v780, 23
      %v782 = vsub.s32 %v781, 127
      %v783 = vand.u32 2147483647, %v307
      %v784 = vand.u32 %v783, 8388607
      %v785 = vor.u32 %v784, 8388608
      %v786 = vsub.s32 0, %v785
      %v787 = vadd.s32 %v782, 1
      %vm788 = vcmp.gt.s32.totalorder %v787, 0
      %v789 = vsel %vm788, %v787, 0
      %v790 = vshrl.u32 %v789, 5
      %v791 = vand.u32 %v789, 31
      %v792 = vsub.s32 32, %v791
      %v793 = vshrl.u32 683565275, %v792
      %v794 = vshll.u32 683565275, %v791
      %v795 = vshrl.u32 2475754826, %v792
      %v796 = vor.u32 %v794, %v795
      %v797 = vshll.u32 2475754826, %v791
      %v798 = vshrl.u32 2131351028, %v792
      %v799 = vor.u32 %v797, %v798
      %v800 = vshll.u32 2131351028, %v791
      %v801 = vshrl.u32 2102212464, %v792
      %v802 = vor.u32 %v800, %v801
      %v803 = vshll.u32 2102212464, %v791
      %v804 = vshrl.u32 920167782, %v792
      %v805 = vor.u32 %v803, %v804
      %v806 = vshll.u32 920167782, %v791
      %v807 = vshrl.u32 1326507024, %v792
      %v808 = vor.u32 %v806, %v807
      %vm809 = vcmp.lt.s32.totalorder %v790, 1
      %vm810 = vcmp.lt.s32.totalorder %v790, 2
      %vm811 = vcmp.lt.s32.totalorder %v790, 3
      %vm812 = vcmp.lt.s32.totalorder %v790, 4
      %v813 = vsel %vm809, %v793, %v796
      %v814 = vsel %vm812, %v802, 2102212464
      %v815 = vsel %vm811, %v799, %v814
      %v816 = vsel %vm810, %v813, %v815
      %v817 = vsel %vm809, %v796, %v799
      %v818 = vsel %vm812, %v805, 920167782
      %v819 = vsel %vm811, %v802, %v818
      %v820 = vsel %vm810, %v817, %v819
      %v821 = vsel %vm809, %v799, %v802
      %v822 = vsel %vm812, %v808, 1326507024
      %v823 = vsel %vm811, %v805, %v822
      %v824 = vsel %vm810, %v821, %v823
      %v825 = vshll.u32 %v785, 8
      %v826 = vand.u32 %v825, 65535
      %v827 = vshrl.u32 %v825, 16
      %v828 = vand.u32 %v824, 65535
      %v829 = vshrl.u32 %v824, 16
      %v830 = vmul.u32 %v826, %v828
      %v831 = vmul.u32 %v826, %v829
      %v832 = vmul.u32 %v827, %v828
      %v833 = vmul.u32 %v827, %v829
      %v834 = vshll.u32 %v831, 16
      %v835 = vshrl.u32 %v831, 16
      %v836 = vshll.u32 %v832, 16
      %v837 = vshrl.u32 %v832, 16
      %vm838 = vc.u32 %v830, %v834
      %v839 = vsel %vm838, 1, 0
      %v840 = vadd.s32 %v830, %v834
      %v841 = vadd.s32 %v833, %v839
      %vm842 = vc.u32 %v840, %v836
      %v843 = vsel %vm842, 1, 0
      %v844 = vadd.s32 %v840, %v836
      %v845 = vadd.s32 %v841, %v843
      %v846 = vadd.s32 %v845, %v835
      %v847 = vadd.s32 %v846, %v837
      %v848 = vand.u32 %v825, 65535
      %v849 = vshrl.u32 %v825, 16
      %v850 = vand.u32 %v820, 65535
      %v851 = vshrl.u32 %v820, 16
      %v852 = vmul.u32 %v848, %v850
      %v853 = vmul.u32 %v848, %v851
      %v854 = vmul.u32 %v849, %v850
      %v855 = vmul.u32 %v849, %v851
      %v856 = vshll.u32 %v853, 16
      %v857 = vshrl.u32 %v853, 16
      %v858 = vshll.u32 %v854, 16
      %v859 = vshrl.u32 %v854, 16
      %vm860 = vc.u32 %v852, %v856
      %v861 = vsel %vm860, 1, 0
      %v862 = vadd.s32 %v852, %v856
      %v863 = vadd.s32 %v855, %v861
      %vm864 = vc.u32 %v862, %v858
      %v865 = vsel %vm864, 1, 0
      %v866 = vadd.s32 %v862, %v858
      %v867 = vadd.s32 %v863, %v865
      %v868 = vadd.s32 %v867, %v857
      %v869 = vadd.s32 %v868, %v859
      %v870 = vmul.u32 %v825, %v816
      %v871 = vadd.s32 %v847, %v866
      %vm872 = vc.u32 %v847, %v866
      %v873 = vadd.s32 %v869, 1
      %v874 = vsel %vm872, %v873, %v869
      %v875 = vadd.s32 %v870, %v874
      %v876 = vadd.s32 %v875, 536870912
      %v877 = vshrl.u32 %v876, 30
      %v878 = vshll.u32 %v877, 30
      %v879 = vsub.s32 %v875, %v878
      %vm880 = vcmp.lt.s32.totalorder %v879, 0
      %v881 = vsub.s32 0, %v879
      %v882 = vsel %vm880, %v881, %v879
      %v883 = vclz %v882
      %v884 = vsub.s32 %v883, 2
      %vm885 = vcmp.gt.s32.totalorder 0, %v884
      %v886 = vsel %vm885, 0, %v884
      %v887 = vsub.s32 32, %v886
      %v888 = vshll.u32 %v879, %v886
      %v889 = vshrl.u32 %v871, %v887
      %v890 = vor.u32 %v888, %v889
      %v891 = vsub.s32 4294967266, %v886
      %v892 = vadd.s32 %v891, 127
      %v893 = vshll.u32 %v892, 23
      %v894 = vor.u32 4788187, %v893
      %v895 = vand.u32 2147483647, %v894
      %v897 = vcvt.s32.f32 %v890
      %v898 = vmul.f32 %v897, %v895
      %v899 = vxor.u32 %v898, 2147483648
      %v900 = vsel %vm779, %v899, %v898
      %v901 = vsub.s32 4, %v877
      %v902 = vsel %vm779, %v901, %v877
      %v903 = vsel %vm778, %v307, %v900
      %v904 = vsel %vm778, 0, %v902
      %v905 = vmul.f32 %v903, %v903
      %v906 = vmul.f32 %v905, -0.001358992
      %v907 = vadd.f32 %v906, 0.041655596
      %v908 = vmul.f32 %v905, %v907
      %v909 = vadd.f32 %v908, -0.4999988
      %v910 = vmul.f32 %v905, %v909
      %v911 = vadd.f32 1.0, %v910
      %v912 = vmul.f32 %v903, %v903
      %v913 = vmul.f32 %v912, -0.00019511016
      %v914 = vadd.f32 %v913, 0.008332121
      %v915 = vmul.f32 %v912, %v914
      %v916 = vadd.f32 %v915, -0.16666654
      %v917 = vmul.f32 %v912, %v916
      %v918 = vadd.f32 %v917, 1.0
      %v919 = vmul.f32 %v918, %v903
      %vm920 = vweird.f32 %v307
      %v921 = vadd.s32 %v904, 3
      %v922 = vand.u32 %v921, 3
      %vm923 = vcmp.lt.s32.totalorder %v922, 2
      %vm924 = vcmp.eq.s32.totalorder %v922, 0
      %v925 = vxor.u32 %v919, 2147483648
      %v926 = vsel %vm924, %v911, %v925
      %vm927 = vcmp.eq.s32.totalorder %v922, 2
      %v928 = vxor.u32 %v911, 2147483648
      %v929 = vsel %vm927, %v928, %v919
      %v930 = vsel %vm923, %v926, %v929
      %v931 = vsel %vm920, nan, %v930
      %v932 = vand.u32 2147483647, %v308
      %vm933 = vcmp.le.f32.partialorder %v932, 0.7853982
      %vm934 = vcmp.lt.s32.totalorder %v308, 0
      %v935 = vand.u32 %v308, 2139095040
      %v936 = vshrl.u32 %v935, 23
      %v937 = vsub.s32 %v936, 127
      %v938 = vand.u32 2147483647, %v308
      %v939 = vand.u32 %v938, 8388607
      %v940 = vor.u32 %v939, 8388608
      %v941 = vsub.s32 0, %v940
      %v942 = vadd.s32 %v937, 1
      %vm943 = vcmp.gt.s32.totalorder %v942, 0
      %v944 = vsel %vm943, %v942, 0
      %v945 = vshrl.u32 %v944, 5
      %v946 = vand.u32 %v944, 31
      %v947 = vsub.s32 32, %v946
      %v948 = vshrl.u32 683565275, %v947
      %v949 = vshll.u32 683565275, %v946
      %v950 = vshrl.u32 2475754826, %v947
      %v951 = vor.u32 %v949, %v950
      %v952 = vshll.u32 2475754826, %v946
      %v953 = vshrl.u32 2131351028, %v947
      %v954 = vor.u32 %v952, %v953
      %v955 = vshll.u32 2131351028, %v946
      %v956 = vshrl.u32 2102212464, %v947
      %v957 = vor.u32 %v955, %v956
      %v958 = vshll.u32 2102212464, %v946
      %v959 = vshrl.u32 920167782, %v947
      %v960 = vor.u32 %v958, %v959
      %v961 = vshll.u32 920167782, %v946
      %v962 = vshrl.u32 1326507024, %v947
      %v963 = vor.u32 %v961, %v962
      %vm964 = vcmp.lt.s32.totalorder %v945, 1
      %vm965 = vcmp.lt.s32.totalorder %v945, 2
      %vm966 = vcmp.lt.s32.totalorder %v945, 3
      %vm967 = vcmp.lt.s32.totalorder %v945, 4
      %v968 = vsel %vm964, %v948, %v951
      %v969 = vsel %vm967, %v957, 2102212464
      %v970 = vsel %vm966, %v954, %v969
      %v971 = vsel %vm965, %v968, %v970
      %v972 = vsel %vm964, %v951, %v954
      %v973 = vsel %vm967, %v960, 920167782
      %v974 = vsel %vm966, %v957, %v973
      %v975 = vsel %vm965, %v972, %v974
      %v976 = vsel %vm964, %v954, %v957
      %v977 = vsel %vm967, %v963, 1326507024
      %v978 = vsel %vm966, %v960, %v977
      %v979 = vsel %vm965, %v976, %v978
      %v980 = vshll.u32 %v940, 8
      %v981 = vand.u32 %v980, 65535
      %v982 = vshrl.u32 %v980, 16
      %v983 = vand.u32 %v979, 65535
      %v984 = vshrl.u32 %v979, 16
      %v985 = vmul.u32 %v981, %v983
      %v986 = vmul.u32 %v981, %v984
      %v987 = vmul.u32 %v982, %v983
      %v988 = vmul.u32 %v982, %v984
      %v989 = vshll.u32 %v986, 16
      %v990 = vshrl.u32 %v986, 16
      %v991 = vshll.u32 %v987, 16
      %v992 = vshrl.u32 %v987, 16
      %vm993 = vc.u32 %v985, %v989
      %v994 = vsel %vm993, 1, 0
      %v995 = vadd.s32 %v985, %v989
      %v996 = vadd.s32 %v988, %v994
      %vm997 = vc.u32 %v995, %v991
      %v998 = vsel %vm997, 1, 0
      %v999 = vadd.s32 %v995, %v991
      %v1000 = vadd.s32 %v996, %v998
      %v1001 = vadd.s32 %v1000, %v990
      %v1002 = vadd.s32 %v1001, %v992
      %v1003 = vand.u32 %v980, 65535
      %v1004 = vshrl.u32 %v980, 16
      %v1005 = vand.u32 %v975, 65535
      %v1006 = vshrl.u32 %v975, 16
      %v1007 = vmul.u32 %v1003, %v1005
      %v1008 = vmul.u32 %v1003, %v1006
      %v1009 = vmul.u32 %v1004, %v1005
      %v1010 = vmul.u32 %v1004, %v1006
      %v1011 = vshll.u32 %v1008, 16
      %v1012 = vshrl.u32 %v1008, 16
      %v1013 = vshll.u32 %v1009, 16
      %v1014 = vshrl.u32 %v1009, 16
      %vm1015 = vc.u32 %v1007, %v1011
      %v1016 = vsel %vm1015, 1, 0
      %v1017 = vadd.s32 %v1007, %v1011
      %v1018 = vadd.s32 %v1010, %v1016
      %vm1019 = vc.u32 %v1017, %v1013
      %v1020 = vsel %vm1019, 1, 0
      %v1021 = vadd.s32 %v1017, %v1013
      %v1022 = vadd.s32 %v1018, %v1020
      %v1023 = vadd.s32 %v1022, %v1012
      %v1024 = vadd.s32 %v1023, %v1014
      %v1025 = vmul.u32 %v980, %v971
      %v1026 = vadd.s32 %v1002, %v1021
      %vm1027 = vc.u32 %v1002, %v1021
      %v1028 = vadd.s32 %v1024, 1
      %v1029 = vsel %vm1027, %v1028, %v1024
      %v1030 = vadd.s32 %v1025, %v1029
      %v1031 = vadd.s32 %v1030, 536870912
      %v1032 = vshrl.u32 %v1031, 30
      %v1033 = vshll.u32 %v1032, 30
      %v1034 = vsub.s32 %v1030, %v1033
      %vm1035 = vcmp.lt.s32.totalorder %v1034, 0
      %v1036 = vsub.s32 0, %v1034
      %v1037 = vsel %vm1035, %v1036, %v1034
      %v1038 = vclz %v1037
      %v1039 = vsub.s32 %v1038, 2
      %vm1040 = vcmp.gt.s32.totalorder 0, %v1039
      %v1041 = vsel %vm1040, 0, %v1039
      %v1042 = vsub.s32 32, %v1041
      %v1043 = vshll.u32 %v1034, %v1041
      %v1044 = vshrl.u32 %v1026, %v1042
      %v1045 = vor.u32 %v1043, %v1044
      %v1046 = vsub.s32 4294967266, %v1041
      %v1047 = vadd.s32 %v1046, 127
      %v1048 = vshll.u32 %v1047, 23
      %v1049 = vor.u32 4788187, %v1048
      %v1050 = vand.u32 2147483647, %v1049
      %v1052 = vcvt.s32.f32 %v1045
      %v1053 = vmul.f32 %v1052, %v1050
      %v1054 = vxor.u32 %v1053, 2147483648
      %v1055 = vsel %vm934, %v1054, %v1053
      %v1056 = vsub.s32 4, %v1032
      %v1057 = vsel %vm934, %v1056, %v1032
      %v1058 = vsel %vm933, %v308, %v1055
      %v1059 = vsel %vm933, 0, %v1057
      %v1060 = vmul.f32 %v1058, %v1058
      %v1061 = vmul.f32 %v1060, -0.001358992
      %v1062 = vadd.f32 %v1061, 0.041655596
      %v1063 = vmul.f32 %v1060, %v1062
      %v1064 = vadd.f32 %v1063, -0.4999988
      %v1065 = vmul.f32 %v1060, %v1064
      %v1066 = vadd.f32 1.0, %v1065
      %v1067 = vmul.f32 %v1058, %v1058
      %v1068 = vmul.f32 %v1067, -0.00019511016
      %v1069 = vadd.f32 %v1068, 0.008332121
      %v1070 = vmul.f32 %v1067, %v1069
      %v1071 = vadd.f32 %v1070, -0.16666654
      %v1072 = vmul.f32 %v1067, %v1071
      %v1073 = vadd.f32 %v1072, 1.0
      %v1074 = vmul.f32 %v1073, %v1058
      %vm1075 = vweird.f32 %v308
      %v1076 = vadd.s32 %v1059, 3
      %v1077 = vand.u32 %v1076, 3
      %vm1078 = vcmp.lt.s32.totalorder %v1077, 2
      %vm1079 = vcmp.eq.s32.totalorder %v1077, 0
      %v1080 = vxor.u32 %v1074, 2147483648
      %v1081 = vsel %vm1079, %v1066, %v1080
      %vm1082 = vcmp.eq.s32.totalorder %v1077, 2
      %v1083 = vxor.u32 %v1066, 2147483648
      %v1084 = vsel %vm1082, %v1083, %v1074
      %v1085 = vsel %vm1078, %v1081, %v1084
      %v1086 = vsel %vm1075, nan, %v1085
      %v1087 = vand.u32 2147483647, %v309
      %vm1088 = vcmp.le.f32.partialorder %v1087, 0.7853982
      %vm1089 = vcmp.lt.s32.totalorder %v309, 0
      %v1090 = vand.u32 %v309, 2139095040
      %v1091 = vshrl.u32 %v1090, 23
      %v1092 = vsub.s32 %v1091, 127
      %v1093 = vand.u32 2147483647, %v309
      %v1094 = vand.u32 %v1093, 8388607
      %v1095 = vor.u32 %v1094, 8388608
      %v1096 = vsub.s32 0, %v1095
      %v1097 = vadd.s32 %v1092, 1
      %vm1098 = vcmp.gt.s32.totalorder %v1097, 0
      %v1099 = vsel %vm1098, %v1097, 0
      %v1100 = vshrl.u32 %v1099, 5
      %v1101 = vand.u32 %v1099, 31
      %v1102 = vsub.s32 32, %v1101
      %v1103 = vshrl.u32 683565275, %v1102
      %v1104 = vshll.u32 683565275, %v1101
      %v1105 = vshrl.u32 2475754826, %v1102
      %v1106 = vor.u32 %v1104, %v1105
      %v1107 = vshll.u32 2475754826, %v1101
      %v1108 = vshrl.u32 2131351028, %v1102
      %v1109 = vor.u32 %v1107, %v1108
      %v1110 = vshll.u32 2131351028, %v1101
      %v1111 = vshrl.u32 2102212464, %v1102
      %v1112 = vor.u32 %v1110, %v1111
      %v1113 = vshll.u32 2102212464, %v1101
      %v1114 = vshrl.u32 920167782, %v1102
      %v1115 = vor.u32 %v1113, %v1114
      %v1116 = vshll.u32 920167782, %v1101
      %v1117 = vshrl.u32 1326507024, %v1102
      %v1118 = vor.u32 %v1116, %v1117
      %vm1119 = vcmp.lt.s32.totalorder %v1100, 1
      %vm1120 = vcmp.lt.s32.totalorder %v1100, 2
      %vm1121 = vcmp.lt.s32.totalorder %v1100, 3
      %vm1122 = vcmp.lt.s32.totalorder %v1100, 4
      %v1123 = vsel %vm1119, %v1103, %v1106
      %v1124 = vsel %vm1122, %v1112, 2102212464
      %v1125 = vsel %vm1121, %v1109, %v1124
      %v1126 = vsel %vm1120, %v1123, %v1125
      %v1127 = vsel %vm1119, %v1106, %v1109
      %v1128 = vsel %vm1122, %v1115, 920167782
      %v1129 = vsel %vm1121, %v1112, %v1128
      %v1130 = vsel %vm1120, %v1127, %v1129
      %v1131 = vsel %vm1119, %v1109, %v1112
      %v1132 = vsel %vm1122, %v1118, 1326507024
      %v1133 = vsel %vm1121, %v1115, %v1132
      %v1134 = vsel %vm1120, %v1131, %v1133
      %v1135 = vshll.u32 %v1095, 8
      %v1136 = vand.u32 %v1135, 65535
      %v1137 = vshrl.u32 %v1135, 16
      %v1138 = vand.u32 %v1134, 65535
      %v1139 = vshrl.u32 %v1134, 16
      %v1140 = vmul.u32 %v1136, %v1138
      %v1141 = vmul.u32 %v1136, %v1139
      %v1142 = vmul.u32 %v1137, %v1138
      %v1143 = vmul.u32 %v1137, %v1139
      %v1144 = vshll.u32 %v1141, 16
      %v1145 = vshrl.u32 %v1141, 16
      %v1146 = vshll.u32 %v1142, 16
      %v1147 = vshrl.u32 %v1142, 16
      %vm1148 = vc.u32 %v1140, %v1144
      %v1149 = vsel %vm1148, 1, 0
      %v1150 = vadd.s32 %v1140, %v1144
      %v1151 = vadd.s32 %v1143, %v1149
      %vm1152 = vc.u32 %v1150, %v1146
      %v1153 = vsel %vm1152, 1, 0
      %v1154 = vadd.s32 %v1150, %v1146
      %v1155 = vadd.s32 %v1151, %v1153
      %v1156 = vadd.s32 %v1155, %v1145
      %v1157 = vadd.s32 %v1156, %v1147
      %v1158 = vand.u32 %v1135, 65535
      %v1159 = vshrl.u32 %v1135, 16
      %v1160 = vand.u32 %v1130, 65535
      %v1161 = vshrl.u32 %v1130, 16
      %v1162 = vmul.u32 %v1158, %v1160
      %v1163 = vmul.u32 %v1158, %v1161
      %v1164 = vmul.u32 %v1159, %v1160
      %v1165 = vmul.u32 %v1159, %v1161
      %v1166 = vshll.u32 %v1163, 16
      %v1167 = vshrl.u32 %v1163, 16
      %v1168 = vshll.u32 %v1164, 16
      %v1169 = vshrl.u32 %v1164, 16
      %vm1170 = vc.u32 %v1162, %v1166
      %v1171 = vsel %vm1170, 1, 0
      %v1172 = vadd.s32 %v1162, %v1166
      %v1173 = vadd.s32 %v1165, %v1171
      %vm1174 = vc.u32 %v1172, %v1168
      %v1175 = vsel %vm1174, 1, 0
      %v1176 = vadd.s32 %v1172, %v1168
      %v1177 = vadd.s32 %v1173, %v1175
      %v1178 = vadd.s32 %v1177, %v1167
      %v1179 = vadd.s32 %v1178, %v1169
      %v1180 = vmul.u32 %v1135, %v1126
      %v1181 = vadd.s32 %v1157, %v1176
      %vm1182 = vc.u32 %v1157, %v1176
      %v1183 = vadd.s32 %v1179, 1
      %v1184 = vsel %vm1182, %v1183, %v1179
      %v1185 = vadd.s32 %v1180, %v1184
      %v1186 = vadd.s32 %v1185, 536870912
      %v1187 = vshrl.u32 %v1186, 30
      %v1188 = vshll.u32 %v1187, 30
      %v1189 = vsub.s32 %v1185, %v1188
      %vm1190 = vcmp.lt.s32.totalorder %v1189, 0
      %v1191 = vsub.s32 0, %v1189
      %v1192 = vsel %vm1190, %v1191, %v1189
      %v1193 = vclz %v1192
      %v1194 = vsub.s32 %v1193, 2
      %vm1195 = vcmp.gt.s32.totalorder 0, %v1194
      %v1196 = vsel %vm1195, 0, %v1194
      %v1197 = vsub.s32 32, %v1196
      %v1198 = vshll.u32 %v1189, %v1196
      %v1199 = vshrl.u32 %v1181, %v1197
      %v1200 = vor.u32 %v1198, %v1199
      %v1201 = vsub.s32 4294967266, %v1196
      %v1202 = vadd.s32 %v1201, 127
      %v1203 = vshll.u32 %v1202, 23
      %v1204 = vor.u32 4788187, %v1203
      %v1205 = vand.u32 2147483647, %v1204
      %v1207 = vcvt.s32.f32 %v1200
      %v1208 = vmul.f32 %v1207, %v1205
      %v1209 = vxor.u32 %v1208, 2147483648
      %v1210 = vsel %vm1089, %v1209, %v1208
      %v1211 = vsub.s32 4, %v1187
      %v1212 = vsel %vm1089, %v1211, %v1187
      %v1213 = vsel %vm1088, %v309, %v1210
      %v1214 = vsel %vm1088, 0, %v1212
      %v1215 = vmul.f32 %v1213, %v1213
      %v1216 = vmul.f32 %v1215, -0.001358992
      %v1217 = vadd.f32 %v1216, 0.041655596
      %v1218 = vmul.f32 %v1215, %v1217
      %v1219 = vadd.f32 %v1218, -0.4999988
      %v1220 = vmul.f32 %v1215, %v1219
      %v1221 = vadd.f32 1.0, %v1220
      %v1222 = vmul.f32 %v1213, %v1213
      %v1223 = vmul.f32 %v1222, -0.00019511016
      %v1224 = vadd.f32 %v1223, 0.008332121
      %v1225 = vmul.f32 %v1222, %v1224
      %v1226 = vadd.f32 %v1225, -0.16666654
      %v1227 = vmul.f32 %v1222, %v1226
      %v1228 = vadd.f32 %v1227, 1.0
      %v1229 = vmul.f32 %v1228, %v1213
      %vm1230 = vweird.f32 %v309
      %v1231 = vadd.s32 %v1214, 3
      %v1232 = vand.u32 %v1231, 3
      %vm1233 = vcmp.lt.s32.totalorder %v1232, 2
      %vm1234 = vcmp.eq.s32.totalorder %v1232, 0
      %v1235 = vxor.u32 %v1229, 2147483648
      %v1236 = vsel %vm1234, %v1221, %v1235
      %vm1237 = vcmp.eq.s32.totalorder %v1232, 2
      %v1238 = vxor.u32 %v1221, 2147483648
      %v1239 = vsel %vm1237, %v1238, %v1229
      %v1240 = vsel %vm1233, %v1236, %v1239
      %v1241 = vsel %vm1230, nan, %v1240
      %v1242 = vand.u32 2147483647, %v310
      %vm1243 = vcmp.le.f32.partialorder %v1242, 0.7853982
      %vm1244 = vcmp.lt.s32.totalorder %v310, 0
      %v1245 = vand.u32 %v310, 2139095040
      %v1246 = vshrl.u32 %v1245, 23
      %v1247 = vsub.s32 %v1246, 127
      %v1248 = vand.u32 2147483647, %v310
      %v1249 = vand.u32 %v1248, 8388607
      %v1250 = vor.u32 %v1249, 8388608
      %v1251 = vsub.s32 0, %v1250
      %v1252 = vadd.s32 %v1247, 1
      %vm1253 = vcmp.gt.s32.totalorder %v1252, 0
      %v1254 = vsel %vm1253, %v1252, 0
      %v1255 = vshrl.u32 %v1254, 5
      %v1256 = vand.u32 %v1254, 31
      %v1257 = vsub.s32 32, %v1256
      %v1258 = vshrl.u32 683565275, %v1257
      %v1259 = vshll.u32 683565275, %v1256
      %v1260 = vshrl.u32 2475754826, %v1257
      %v1261 = vor.u32 %v1259, %v1260
      %v1262 = vshll.u32 2475754826, %v1256
      %v1263 = vshrl.u32 2131351028, %v1257
      %v1264 = vor.u32 %v1262, %v1263
      %v1265 = vshll.u32 2131351028, %v1256
      %v1266 = vshrl.u32 2102212464, %v1257
      %v1267 = vor.u32 %v1265, %v1266
      %v1268 = vshll.u32 2102212464, %v1256
      %v1269 = vshrl.u32 920167782, %v1257
      %v1270 = vor.u32 %v1268, %v1269
      %v1271 = vshll.u32 920167782, %v1256
      %v1272 = vshrl.u32 1326507024, %v1257
      %v1273 = vor.u32 %v1271, %v1272
      %vm1274 = vcmp.lt.s32.totalorder %v1255, 1
      %vm1275 = vcmp.lt.s32.totalorder %v1255, 2
      %vm1276 = vcmp.lt.s32.totalorder %v1255, 3
      %vm1277 = vcmp.lt.s32.totalorder %v1255, 4
      %v1278 = vsel %vm1274, %v1258, %v1261
      %v1279 = vsel %vm1277, %v1267, 2102212464
      %v1280 = vsel %vm1276, %v1264, %v1279
      %v1281 = vsel %vm1275, %v1278, %v1280
      %v1282 = vsel %vm1274, %v1261, %v1264
      %v1283 = vsel %vm1277, %v1270, 920167782
      %v1284 = vsel %vm1276, %v1267, %v1283
      %v1285 = vsel %vm1275, %v1282, %v1284
      %v1286 = vsel %vm1274, %v1264, %v1267
      %v1287 = vsel %vm1277, %v1273, 1326507024
      %v1288 = vsel %vm1276, %v1270, %v1287
      %v1289 = vsel %vm1275, %v1286, %v1288
      %v1290 = vshll.u32 %v1250, 8
      %v1291 = vand.u32 %v1290, 65535
      %v1292 = vshrl.u32 %v1290, 16
      %v1293 = vand.u32 %v1289, 65535
      %v1294 = vshrl.u32 %v1289, 16
      %v1295 = vmul.u32 %v1291, %v1293
      %v1296 = vmul.u32 %v1291, %v1294
      %v1297 = vmul.u32 %v1292, %v1293
      %v1298 = vmul.u32 %v1292, %v1294
      %v1299 = vshll.u32 %v1296, 16
      %v1300 = vshrl.u32 %v1296, 16
      %v1301 = vshll.u32 %v1297, 16
      %v1302 = vshrl.u32 %v1297, 16
      %vm1303 = vc.u32 %v1295, %v1299
      %v1304 = vsel %vm1303, 1, 0
      %v1305 = vadd.s32 %v1295, %v1299
      %v1306 = vadd.s32 %v1298, %v1304
      %vm1307 = vc.u32 %v1305, %v1301
      %v1308 = vsel %vm1307, 1, 0
      %v1309 = vadd.s32 %v1305, %v1301
      %v1310 = vadd.s32 %v1306, %v1308
      %v1311 = vadd.s32 %v1310, %v1300
      %v1312 = vadd.s32 %v1311, %v1302
      %v1313 = vand.u32 %v1290, 65535
      %v1314 = vshrl.u32 %v1290, 16
      %v1315 = vand.u32 %v1285, 65535
      %v1316 = vshrl.u32 %v1285, 16
      %v1317 = vmul.u32 %v1313, %v1315
      %v1318 = vmul.u32 %v1313, %v1316
      %v1319 = vmul.u32 %v1314, %v1315
      %v1320 = vmul.u32 %v1314, %v1316
      %v1321 = vshll.u32 %v1318, 16
      %v1322 = vshrl.u32 %v1318, 16
      %v1323 = vshll.u32 %v1319, 16
      %v1324 = vshrl.u32 %v1319, 16
      %vm1325 = vc.u32 %v1317, %v1321
      %v1326 = vsel %vm1325, 1, 0
      %v1327 = vadd.s32 %v1317, %v1321
      %v1328 = vadd.s32 %v1320, %v1326
      %vm1329 = vc.u32 %v1327, %v1323
      %v1330 = vsel %vm1329, 1, 0
      %v1331 = vadd.s32 %v1327, %v1323
      %v1332 = vadd.s32 %v1328, %v1330
      %v1333 = vadd.s32 %v1332, %v1322
      %v1334 = vadd.s32 %v1333, %v1324
      %v1335 = vmul.u32 %v1290, %v1281
      %v1336 = vadd.s32 %v1312, %v1331
      %vm1337 = vc.u32 %v1312, %v1331
      %v1338 = vadd.s32 %v1334, 1
      %v1339 = vsel %vm1337, %v1338, %v1334
      %v1340 = vadd.s32 %v1335, %v1339
      %v1341 = vadd.s32 %v1340, 536870912
      %v1342 = vshrl.u32 %v1341, 30
      %v1343 = vshll.u32 %v1342, 30
      %v1344 = vsub.s32 %v1340, %v1343
      %vm1345 = vcmp.lt.s32.totalorder %v1344, 0
      %v1346 = vsub.s32 0, %v1344
      %v1347 = vsel %vm1345, %v1346, %v1344
      %v1348 = vclz %v1347
      %v1349 = vsub.s32 %v1348, 2
      %vm1350 = vcmp.gt.s32.totalorder 0, %v1349
      %v1351 = vsel %vm1350, 0, %v1349
      %v1352 = vsub.s32 32, %v1351
      %v1353 = vshll.u32 %v1344, %v1351
      %v1354 = vshrl.u32 %v1336, %v1352
      %v1355 = vor.u32 %v1353, %v1354
      %v1356 = vsub.s32 4294967266, %v1351
      %v1357 = vadd.s32 %v1356, 127
      %v1358 = vshll.u32 %v1357, 23
      %v1359 = vor.u32 4788187, %v1358
      %v1360 = vand.u32 2147483647, %v1359
      %v1362 = vcvt.s32.f32 %v1355
      %v1363 = vmul.f32 %v1362, %v1360
      %v1364 = vxor.u32 %v1363, 2147483648
      %v1365 = vsel %vm1244, %v1364, %v1363
      %v1366 = vsub.s32 4, %v1342
      %v1367 = vsel %vm1244, %v1366, %v1342
      %v1368 = vsel %vm1243, %v310, %v1365
      %v1369 = vsel %vm1243, 0, %v1367
      %v1370 = vmul.f32 %v1368, %v1368
      %v1371 = vmul.f32 %v1370, -0.001358992
      %v1372 = vadd.f32 %v1371, 0.041655596
      %v1373 = vmul.f32 %v1370, %v1372
      %v1374 = vadd.f32 %v1373, -0.4999988
      %v1375 = vmul.f32 %v1370, %v1374
      %v1376 = vadd.f32 1.0, %v1375
      %v1377 = vmul.f32 %v1368, %v1368
      %v1378 = vmul.f32 %v1377, -0.00019511016
      %v1379 = vadd.f32 %v1378, 0.008332121
      %v1380 = vmul.f32 %v1377, %v1379
      %v1381 = vadd.f32 %v1380, -0.16666654
      %v1382 = vmul.f32 %v1377, %v1381
      %v1383 = vadd.f32 %v1382, 1.0
      %v1384 = vmul.f32 %v1383, %v1368
      %vm1385 = vweird.f32 %v310
      %v1386 = vadd.s32 %v1369, 3
      %v1387 = vand.u32 %v1386, 3
      %vm1388 = vcmp.lt.s32.totalorder %v1387, 2
      %vm1389 = vcmp.eq.s32.totalorder %v1387, 0
      %v1390 = vxor.u32 %v1384, 2147483648
      %v1391 = vsel %vm1389, %v1376, %v1390
      %vm1392 = vcmp.eq.s32.totalorder %v1387, 2
      %v1393 = vxor.u32 %v1376, 2147483648
      %v1394 = vsel %vm1392, %v1393, %v1384
      %v1395 = vsel %vm1388, %v1391, %v1394
      %v1396 = vsel %vm1385, nan, %v1395
      %v1397 = vand.u32 2147483647, %v311
      %vm1398 = vcmp.le.f32.partialorder %v1397, 0.7853982
      %vm1399 = vcmp.lt.s32.totalorder %v311, 0
      %v1400 = vand.u32 %v311, 2139095040
      %v1401 = vshrl.u32 %v1400, 23
      %v1402 = vsub.s32 %v1401, 127
      %v1403 = vand.u32 2147483647, %v311
      %v1404 = vand.u32 %v1403, 8388607
      %v1405 = vor.u32 %v1404, 8388608
      %v1406 = vsub.s32 0, %v1405
      %v1407 = vadd.s32 %v1402, 1
      %vm1408 = vcmp.gt.s32.totalorder %v1407, 0
      %v1409 = vsel %vm1408, %v1407, 0
      %v1410 = vshrl.u32 %v1409, 5
      %v1411 = vand.u32 %v1409, 31
      %v1412 = vsub.s32 32, %v1411
      %v1413 = vshrl.u32 683565275, %v1412
      %v1414 = vshll.u32 683565275, %v1411
      %v1415 = vshrl.u32 2475754826, %v1412
      %v1416 = vor.u32 %v1414, %v1415
      %v1417 = vshll.u32 2475754826, %v1411
      %v1418 = vshrl.u32 2131351028, %v1412
      %v1419 = vor.u32 %v1417, %v1418
      %v1420 = vshll.u32 2131351028, %v1411
      %v1421 = vshrl.u32 2102212464, %v1412
      %v1422 = vor.u32 %v1420, %v1421
      %v1423 = vshll.u32 2102212464, %v1411
      %v1424 = vshrl.u32 920167782, %v1412
      %v1425 = vor.u32 %v1423, %v1424
      %v1426 = vshll.u32 920167782, %v1411
      %v1427 = vshrl.u32 1326507024, %v1412
      %v1428 = vor.u32 %v1426, %v1427
      %vm1429 = vcmp.lt.s32.totalorder %v1410, 1
      %vm1430 = vcmp.lt.s32.totalorder %v1410, 2
      %vm1431 = vcmp.lt.s32.totalorder %v1410, 3
      %vm1432 = vcmp.lt.s32.totalorder %v1410, 4
      %v1433 = vsel %vm1429, %v1413, %v1416
      %v1434 = vsel %vm1432, %v1422, 2102212464
      %v1435 = vsel %vm1431, %v1419, %v1434
      %v1436 = vsel %vm1430, %v1433, %v1435
      %v1437 = vsel %vm1429, %v1416, %v1419
      %v1438 = vsel %vm1432, %v1425, 920167782
      %v1439 = vsel %vm1431, %v1422, %v1438
      %v1440 = vsel %vm1430, %v1437, %v1439
      %v1441 = vsel %vm1429, %v1419, %v1422
      %v1442 = vsel %vm1432, %v1428, 1326507024
      %v1443 = vsel %vm1431, %v1425, %v1442
      %v1444 = vsel %vm1430, %v1441, %v1443
      %v1445 = vshll.u32 %v1405, 8
      %v1446 = vand.u32 %v1445, 65535
      %v1447 = vshrl.u32 %v1445, 16
      %v1448 = vand.u32 %v1444, 65535
      %v1449 = vshrl.u32 %v1444, 16
      %v1450 = vmul.u32 %v1446, %v1448
      %v1451 = vmul.u32 %v1446, %v1449
      %v1452 = vmul.u32 %v1447, %v1448
      %v1453 = vmul.u32 %v1447, %v1449
      %v1454 = vshll.u32 %v1451, 16
      %v1455 = vshrl.u32 %v1451, 16
      %v1456 = vshll.u32 %v1452, 16
      %v1457 = vshrl.u32 %v1452, 16
      %vm1458 = vc.u32 %v1450, %v1454
      %v1459 = vsel %vm1458, 1, 0
      %v1460 = vadd.s32 %v1450, %v1454
      %v1461 = vadd.s32 %v1453, %v1459
      %vm1462 = vc.u32 %v1460, %v1456
      %v1463 = vsel %vm1462, 1, 0
      %v1464 = vadd.s32 %v1460, %v1456
      %v1465 = vadd.s32 %v1461, %v1463
      %v1466 = vadd.s32 %v1465, %v1455
      %v1467 = vadd.s32 %v1466, %v1457
      %v1468 = vand.u32 %v1445, 65535
      %v1469 = vshrl.u32 %v1445, 16
      %v1470 = vand.u32 %v1440, 65535
      %v1471 = vshrl.u32 %v1440, 16
      %v1472 = vmul.u32 %v1468, %v1470
      %v1473 = vmul.u32 %v1468, %v1471
      %v1474 = vmul.u32 %v1469, %v1470
      %v1475 = vmul.u32 %v1469, %v1471
      %v1476 = vshll.u32 %v1473, 16
      %v1477 = vshrl.u32 %v1473, 16
      %v1478 = vshll.u32 %v1474, 16
      %v1479 = vshrl.u32 %v1474, 16
      %vm1480 = vc.u32 %v1472, %v1476
      %v1481 = vsel %vm1480, 1, 0
      %v1482 = vadd.s32 %v1472, %v1476
      %v1483 = vadd.s32 %v1475, %v1481
      %vm1484 = vc.u32 %v1482, %v1478
      %v1485 = vsel %vm1484, 1, 0
      %v1486 = vadd.s32 %v1482, %v1478
      %v1487 = vadd.s32 %v1483, %v1485
      %v1488 = vadd.s32 %v1487, %v1477
      %v1489 = vadd.s32 %v1488, %v1479
      %v1490 = vmul.u32 %v1445, %v1436
      %v1491 = vadd.s32 %v1467, %v1486
      %vm1492 = vc.u32 %v1467, %v1486
      %v1493 = vadd.s32 %v1489, 1
      %v1494 = vsel %vm1492, %v1493, %v1489
      %v1495 = vadd.s32 %v1490, %v1494
      %v1496 = vadd.s32 %v1495, 536870912
      %v1497 = vshrl.u32 %v1496, 30
      %v1498 = vshll.u32 %v1497, 30
      %v1499 = vsub.s32 %v1495, %v1498
      %vm1500 = vcmp.lt.s32.totalorder %v1499, 0
      %v1501 = vsub.s32 0, %v1499
      %v1502 = vsel %vm1500, %v1501, %v1499
      %v1503 = vclz %v1502
      %v1504 = vsub.s32 %v1503, 2
      %vm1505 = vcmp.gt.s32.totalorder 0, %v1504
      %v1506 = vsel %vm1505, 0, %v1504
      %v1507 = vsub.s32 32, %v1506
      %v1508 = vshll.u32 %v1499, %v1506
      %v1509 = vshrl.u32 %v1491, %v1507
      %v1510 = vor.u32 %v1508, %v1509
      %v1511 = vsub.s32 4294967266, %v1506
      %v1512 = vadd.s32 %v1511, 127
      %v1513 = vshll.u32 %v1512, 23
      %v1514 = vor.u32 4788187, %v1513
      %v1515 = vand.u32 2147483647, %v1514
      %v1517 = vcvt.s32.f32 %v1510
      %v1518 = vmul.f32 %v1517, %v1515
      %v1519 = vxor.u32 %v1518, 2147483648
      %v1520 = vsel %vm1399, %v1519, %v1518
      %v1521 = vsub.s32 4, %v1497
      %v1522 = vsel %vm1399, %v1521, %v1497
      %v1523 = vsel %vm1398, %v311, %v1520
      %v1524 = vsel %vm1398, 0, %v1522
      %v1525 = vmul.f32 %v1523, %v1523
      %v1526 = vmul.f32 %v1525, -0.001358992
      %v1527 = vadd.f32 %v1526, 0.041655596
      %v1528 = vmul.f32 %v1525, %v1527
      %v1529 = vadd.f32 %v1528, -0.4999988
      %v1530 = vmul.f32 %v1525, %v1529
      %v1531 = vadd.f32 1.0, %v1530
      %v1532 = vmul.f32 %v1523, %v1523
      %v1533 = vmul.f32 %v1532, -0.00019511016
      %v1534 = vadd.f32 %v1533, 0.008332121
      %v1535 = vmul.f32 %v1532, %v1534
      %v1536 = vadd.f32 %v1535, -0.16666654
      %v1537 = vmul.f32 %v1532, %v1536
      %v1538 = vadd.f32 %v1537, 1.0
      %v1539 = vmul.f32 %v1538, %v1523
      %vm1540 = vweird.f32 %v311
      %v1541 = vadd.s32 %v1524, 3
      %v1542 = vand.u32 %v1541, 3
      %vm1543 = vcmp.lt.s32.totalorder %v1542, 2
      %vm1544 = vcmp.eq.s32.totalorder %v1542, 0
      %v1545 = vxor.u32 %v1539, 2147483648
      %v1546 = vsel %vm1544, %v1531, %v1545
      %vm1547 = vcmp.eq.s32.totalorder %v1542, 2
      %v1548 = vxor.u32 %v1531, 2147483648
      %v1549 = vsel %vm1547, %v1548, %v1539
      %v1550 = vsel %vm1543, %v1546, %v1549
      %v1551 = vsel %vm1540, nan, %v1550
      %1552 = vst.msk [vmem:[%s217] sm:$0xff] %vm238, %v466
      %1553 = vst.msk [vmem:[%s217 + $0x8] sm:$0xff] %vm238, %v621
      %1554 = vst.msk [vmem:[%s217 + $0x10] sm:$0xff] %vm238, %v776
      %1555 = vst.msk [vmem:[%s217 + $0x18] sm:$0xff] %vm238, %v931
      %1556 = vst.msk [vmem:[%s217 + $0x20] sm:$0xff] %vm238, %v1086
      %1557 = vst.msk [vmem:[%s217 + $0x28] sm:$0xff] %vm238, %v1241
      %1558 = vst.msk [vmem:[%s217 + $0x30] sm:$0xff] %vm238, %v1396
      %1559 = vst.msk [vmem:[%s217 + $0x38] sm:$0xff] %vm238, %v1551
      %s1560 = smul.u32 8, %s28
      %p1561 = scmp.lt.s32.totalorder %s27, 2
      %s1562 = scalar_select %p1561, %s27, 2
      %p1563 = scmp.lt.s32.totalorder %s1560, 7
      %s1564 = scalar_select %p1563, %s1560, 7
      %s1565 = smul.addr %s1562, 8
      %s1566 = sadd.s32 %s1564, %s1565
      %s1567 = smul.addr %s1566, 8
      %s1568 = scalar_lea.vmem %s4, %s1567
      // Predicated region
      $region33: #{tpu_custom_call.1} parent=31 // pred_check
        %p1569 = pneg %p125
      $region34: #{tpu_custom_call.1} parent=31 // pred_check_branch
        %1571 = sbr.rel (%p1569) target = $region36
      $region35: #{tpu_custom_call.1} parent=31 // pred_region
        %s1572 = smul.u32 8, %s28
      $region36: #{tpu_custom_call.1} parent=31 // pred_fallthru
        _
    $region32: #{tpu_custom_call.1} parent=5 // pred_fallthru
      _
    %p1573 = scmp.le.s32.totalorder 2, %s18
    // Predicated region
    $region37: #{tpu_custom_call.1} parent=5 // pred_check
      %p1574 = pneg %p1573
    $region38: #{tpu_custom_call.1} parent=5 // pred_check_branch
      %1576 = sbr.rel (%p1574) target = $region40
    $region39: #{tpu_custom_call.1} parent=5 // pred_region
      %s1577 = ssub.s32 %s18, 2
      // Predicated region
      $region41: #{tpu_custom_call.1} parent=39 // pred_check
        %p1578 = pneg %p131
      $region42: #{tpu_custom_call.1} parent=39 // pred_check_branch
        %1580 = sbr.rel (%p1578) target = $region44
      $region43: #{tpu_custom_call.1} parent=39 // pred_region
        %s1581 = smul.u32 8, %s30
        %p1582 = scmp.lt.s32.totalorder %s29, 2
        %s1583 = scalar_select %p1582, %s29, 2
        %p1584 = scmp.lt.s32.totalorder %s1581, 7
        %s1585 = scalar_select %p1584, %s1581, 7
        %s1586 = smul.addr %s1583, 8
        %s1587 = sadd.s32 %s1585, %s1586
        %s1588 = smul.addr %s1587, 8
        %s1589 = scalar_lea.vmem %s4, %s1588
      $region44: #{tpu_custom_call.1} parent=39 // pred_fallthru
        _
    $region40: #{tpu_custom_call.1} parent=5 // pred_fallthru
      _
  $region6: #{tpu_custom_call.1} parent=0 // loop_footer
    %s22 = sadd.s32 1, %s18
  $region7: #{tpu_custom_call.1} parent=0 // loop_footer_branch
    %17 = sbr.rel target = $region3
  $region8: #{tpu_custom_call.1} parent=0 // loop_exit
    _

</llo_original>
